<compile_context>
chip_gen: v6e
topology: v6e:2x2x1
jax: 0.10.0
libtpu: 0.0.40
codegen_flags: <defaults>
</compile_context>

<pallas_src>
import functools

import jax
import jax.numpy as jnp
from jax.experimental import pallas as pl
from jax.experimental.pallas import tpu as pltpu

# Logical layer sizes from the PyTorch module.
DIMS = [28 * 28, 256, 128, 64, 128, 256, 28 * 28]
# Lane-padded sizes (multiples of 128) used inside the kernel. Padded
# rows/cols are zero-filled, so values on the real lanes are unchanged.
PAD_DIMS = [896, 256, 128, 128, 128, 256, 896]

_SUBLANE_BF16 = 16  # bf16 packs 16 sublanes per vreg


def _round_up(n, m):
    return ((n + m - 1) // m) * m


def _autoencoder_kernel(x_ref,
                        w1, b1, w2, b2, w3, b3,
                        w4, b4, w5, b5, w6, b6,
                        o_ref):
    """Fused 6-layer MLP on one batch tile.

    Matmuls: bf16 operands on the MXU, f32 accumulation.
    Bias add + ReLU: f32 on the VPU.  Sigmoid reciprocal: EUP.
    """
    h = x_ref[...]  # bf16 (block_b, 896)

    def dense(h_bf16, w_ref, b_ref):
        acc = jnp.dot(h_bf16, w_ref[...], preferred_element_type=jnp.float32)
        return acc + b_ref[...]  # bias is f32

    def relu_bf16(y_f32):
        return jnp.maximum(y_f32, 0.0).astype(jnp.bfloat16)

    # Encoder.
    h = relu_bf16(dense(h, w1, b1))
    h = relu_bf16(dense(h, w2, b2))
    h = relu_bf16(dense(h, w3, b3))
    # Decoder.
    h = relu_bf16(dense(h, w4, b4))
    h = relu_bf16(dense(h, w5, b5))
    logits = dense(h, w6, b6)                                   # f32
    sig = pl.reciprocal(1.0 + jnp.exp(-logits), approx=True)    # exp + rcp on EUP
    o_ref[...] = sig.astype(o_ref.dtype)


def init_params(key):
    """Deterministic parameter init (Kaiming-uniform-like, PyTorch shapes)."""
    params = []
    for li in range(len(DIMS) - 1):
        fan_in, fan_out = DIMS[li], DIMS[li + 1]
        key, kw, kb = jax.random.split(key, 3)
        bound = 1.0 / jnp.sqrt(fan_in)
        # Stored as (in, out) — i.e. PyTorch weight (out, in) transposed.
        w = jax.random.uniform(kw, (fan_in, fan_out), jnp.float32, -bound, bound)
        b = jax.random.uniform(kb, (1, fan_out), jnp.float32, -bound, bound)
        params.append((w, b))
    return params


def prepare_params(params):
    """Zero-pad weights/biases to lane-dense (128-multiple) shapes; weights
    cast to bf16 (MXU operands), biases kept f32 (added post-accumulation)."""
    prepped = []
    for li, (w, b) in enumerate(params):
        pin, pout = PAD_DIMS[li], PAD_DIMS[li + 1]
        wp = jnp.zeros((pin, pout), jnp.float32).at[:w.shape[0], :w.shape[1]].set(w)
        bp = jnp.zeros((1, pout), jnp.float32).at[:, :b.shape[1]].set(b)
        prepped.append((wp.astype(jnp.bfloat16), bp))
    return prepped


@functools.partial(jax.jit, static_argnames=("block_b",))
def autoencoder_forward(x, prepped_params, *, block_b=256):
    """x: (B, 784) float32 -> (B, 784) float32."""
    B, D = x.shape
    assert D == DIMS[0]

    # Effective batch tile: multiple of 16 sublanes (bf16), no larger than needed.
    bb = min(block_b, _round_up(B, _SUBLANE_BF16))
    bb = _round_up(bb, _SUBLANE_BF16)
    Bp = _round_up(B, bb)

    # Pad batch to a tile multiple, features 784 -> 896 lanes, cast to bf16.
    xp = jnp.zeros((Bp, PAD_DIMS[0]), jnp.bfloat16)
    xp = xp.at[:B, :D].set(x.astype(jnp.bfloat16))

    flat = [t for pair in prepped_params for t in pair]

    # x / out tiled over the batch; every weight/bias is a single full-array
    # block with a constant index_map, so Mosaic fetches it into VMEM once
    # and keeps it resident across the whole grid (no per-step re-DMA).
    in_specs = [pl.BlockSpec((bb, PAD_DIMS[0]), lambda i: (i, 0))]
    for t in flat:
        in_specs.append(pl.BlockSpec(t.shape, lambda i: (0, 0)))
    out_spec = pl.BlockSpec((bb, PAD_DIMS[-1]), lambda i: (i, 0))

    out_padded = pl.pallas_call(
        _autoencoder_kernel,
        out_shape=jax.ShapeDtypeStruct((Bp, PAD_DIMS[-1]), jnp.float32),
        grid_spec=pltpu.PrefetchScalarGridSpec(
            num_scalar_prefetch=0,
            grid=(Bp // bb,),
            in_specs=in_specs,
            out_specs=out_spec,
        ),
        compiler_params=pltpu.CompilerParams(
            dimension_semantics=("parallel",),
            vmem_limit_bytes=32 * 1024 * 1024,
        ),
    )(xp, *flat)

    # Slice away the batch padding and the 896->784 lane padding.
    return out_padded[:B, :DIMS[-1]]


def reference_forward(x, params):
    """Pure-JAX f32 reference matching the PyTorch forward."""
    h = x
    for li, (w, b) in enumerate(params):
        h = h @ w + b
        if li < len(params) - 1:
            h = jnp.maximum(h, 0.0)
        else:
            h = jax.nn.sigmoid(h)
    return h


if __name__ == "__main__":
    key = jax.random.PRNGKey(0)
    kx, kp = jax.random.split(key)

    params = init_params(kp)
    prepped = prepare_params(params)

    # Small shape consistent with the module (flattened 28x28 inputs).
    B_small = 8
    x_small = jax.random.uniform(kx, (B_small, 28 * 28), jnp.float32)
    out_small = jax.block_until_ready(autoencoder_forward(x_small, prepped))
    ref_small = reference_forward(x_small, params)
    assert out_small.shape == (B_small, 28 * 28)
    assert jnp.allclose(out_small, ref_small, atol=2e-2, rtol=0), "small-batch mismatch"

    # Larger batch exercises the performant tiled path (grid of 2 tiles so the
    # 'parallel' batch axis shards across both v7x TensorCores).
    B_big = 512
    x_big = jax.random.uniform(kx, (B_big, 28 * 28), jnp.float32)
    out_big = jax.block_until_ready(autoencoder_forward(x_big, prepped, block_b=256))
    ref_big = reference_forward(x_big, params)
    assert out_big.shape == (B_big, 28 * 28)
    assert jnp.allclose(out_big, ref_big, atol=2e-2, rtol=0), "big-batch mismatch"

    print("KERNEL_OK")
</pallas_src>

<mosaic_0001>
module attributes {stable_mosaic.version = 11 : i64} {
  func.func @_autoencoder_kernel(%arg0: i32, %arg1: memref<16x896xbf16, #tpu.memory_space<vmem>>, %arg2: memref<896x256xbf16, #tpu.memory_space<vmem>>, %arg3: memref<1x256xf32, #tpu.memory_space<vmem>>, %arg4: memref<256x128xbf16, #tpu.memory_space<vmem>>, %arg5: memref<1x128xf32, #tpu.memory_space<vmem>>, %arg6: memref<128x128xbf16, #tpu.memory_space<vmem>>, %arg7: memref<1x128xf32, #tpu.memory_space<vmem>>, %arg8: memref<128x128xbf16, #tpu.memory_space<vmem>>, %arg9: memref<1x128xf32, #tpu.memory_space<vmem>>, %arg10: memref<128x256xbf16, #tpu.memory_space<vmem>>, %arg11: memref<1x256xf32, #tpu.memory_space<vmem>>, %arg12: memref<256x896xbf16, #tpu.memory_space<vmem>>, %arg13: memref<1x896xf32, #tpu.memory_space<vmem>>, %arg14: memref<16x896xf32, #tpu.memory_space<vmem>>) attributes {dimension_semantics = [#tpu.dimension_semantics<parallel>], iteration_bounds = array<i64: 1>, scalar_prefetch = 0 : i64, scratch_operands = 0 : i64, tpu.core_type = #tpu.core_type<tc>, window_params = [{transform_indices = @transform_0, window_bounds = array<i64: 16, 896>}, {pipeline_mode = #tpu.pipeline_mode<synchronous>, transform_indices = @transform_1, window_bounds = array<i64: 896, 256>}, {pipeline_mode = #tpu.pipeline_mode<synchronous>, transform_indices = @transform_2, window_bounds = array<i64: 1, 256>}, {pipeline_mode = #tpu.pipeline_mode<synchronous>, transform_indices = @transform_3, window_bounds = array<i64: 256, 128>}, {pipeline_mode = #tpu.pipeline_mode<synchronous>, transform_indices = @transform_4, window_bounds = array<i64: 1, 128>}, {pipeline_mode = #tpu.pipeline_mode<synchronous>, transform_indices = @transform_5, window_bounds = array<i64: 128, 128>}, {pipeline_mode = #tpu.pipeline_mode<synchronous>, transform_indices = @transform_6, window_bounds = array<i64: 1, 128>}, {pipeline_mode = #tpu.pipeline_mode<synchronous>, transform_indices = @transform_7, window_bounds = array<i64: 128, 128>}, {pipeline_mode = #tpu.pipeline_mode<synchronous>, transform_indices = @transform_8, window_bounds = array<i64: 1, 128>}, {pipeline_mode = #tpu.pipeline_mode<synchronous>, transform_indices = @transform_9, window_bounds = array<i64: 128, 256>}, {pipeline_mode = #tpu.pipeline_mode<synchronous>, transform_indices = @transform_10, window_bounds = array<i64: 1, 256>}, {pipeline_mode = #tpu.pipeline_mode<synchronous>, transform_indices = @transform_11, window_bounds = array<i64: 256, 896>}, {pipeline_mode = #tpu.pipeline_mode<synchronous>, transform_indices = @transform_12, window_bounds = array<i64: 1, 896>}, {transform_indices = @transform_13, window_bounds = array<i64: 16, 896>}]} {
    %c0 = arith.constant 0 : index
    %c0_0 = arith.constant 0 : index
    %0 = vector.load %arg1[%c0, %c0_0] : memref<16x896xbf16, #tpu.memory_space<vmem>>, vector<16x896xbf16>
    %c0_1 = arith.constant 0 : index
    %c0_2 = arith.constant 0 : index
    %1 = vector.load %arg2[%c0_1, %c0_2] : memref<896x256xbf16, #tpu.memory_space<vmem>>, vector<896x256xbf16>
    %cst = arith.constant dense<0.000000e+00> : vector<16x256xf32>
    %2 = tpu.matmul %0, %1, %cst {dimension_numbers = #tpu.dot_dimension_numbers<[1], [0], [0], [1], [0, 0, 1, 1], [], []>} : vector<16x896xbf16>, vector<896x256xbf16>, vector<16x256xf32> -> vector<16x256xf32>
    %c0_3 = arith.constant 0 : index
    %c0_4 = arith.constant 0 : index
    %3 = vector.load %arg3[%c0_3, %c0_4] : memref<1x256xf32, #tpu.memory_space<vmem>>, vector<1x256xf32>
    %4 = vector.broadcast %3 : vector<1x256xf32> to vector<16x256xf32>
    %5 = arith.addf %2, %4 : vector<16x256xf32>
    %cst_5 = arith.constant 0.000000e+00 : f32
    %6 = vector.broadcast %cst_5 : f32 to vector<16x256xf32>
    %7 = arith.maximumf %5, %6 : vector<16x256xf32>
    %8 = arith.truncf %7 : vector<16x256xf32> to vector<16x256xbf16>
    %c0_6 = arith.constant 0 : index
    %c0_7 = arith.constant 0 : index
    %9 = vector.load %arg4[%c0_6, %c0_7] : memref<256x128xbf16, #tpu.memory_space<vmem>>, vector<256x128xbf16>
    %cst_8 = arith.constant dense<0.000000e+00> : vector<16x128xf32>
    %10 = tpu.matmul %8, %9, %cst_8 {dimension_numbers = #tpu.dot_dimension_numbers<[1], [0], [0], [1], [0, 0, 1, 1], [], []>} : vector<16x256xbf16>, vector<256x128xbf16>, vector<16x128xf32> -> vector<16x128xf32>
    %c0_9 = arith.constant 0 : index
    %c0_10 = arith.constant 0 : index
    %11 = vector.load %arg5[%c0_9, %c0_10] : memref<1x128xf32, #tpu.memory_space<vmem>>, vector<1x128xf32>
    %12 = vector.broadcast %11 : vector<1x128xf32> to vector<16x128xf32>
    %13 = arith.addf %10, %12 : vector<16x128xf32>
    %cst_11 = arith.constant 0.000000e+00 : f32
    %14 = vector.broadcast %cst_11 : f32 to vector<16x128xf32>
    %15 = arith.maximumf %13, %14 : vector<16x128xf32>
    %16 = arith.truncf %15 : vector<16x128xf32> to vector<16x128xbf16>
    %c0_12 = arith.constant 0 : index
    %c0_13 = arith.constant 0 : index
    %17 = vector.load %arg6[%c0_12, %c0_13] : memref<128x128xbf16, #tpu.memory_space<vmem>>, vector<128x128xbf16>
    %cst_14 = arith.constant dense<0.000000e+00> : vector<16x128xf32>
    %18 = tpu.matmul %16, %17, %cst_14 {dimension_numbers = #tpu.dot_dimension_numbers<[1], [0], [0], [1], [0, 0, 1, 1], [], []>} : vector<16x128xbf16>, vector<128x128xbf16>, vector<16x128xf32> -> vector<16x128xf32>
    %c0_15 = arith.constant 0 : index
    %c0_16 = arith.constant 0 : index
    %19 = vector.load %arg7[%c0_15, %c0_16] : memref<1x128xf32, #tpu.memory_space<vmem>>, vector<1x128xf32>
    %20 = vector.broadcast %19 : vector<1x128xf32> to vector<16x128xf32>
    %21 = arith.addf %18, %20 : vector<16x128xf32>
    %cst_17 = arith.constant 0.000000e+00 : f32
    %22 = vector.broadcast %cst_17 : f32 to vector<16x128xf32>
    %23 = arith.maximumf %21, %22 : vector<16x128xf32>
    %24 = arith.truncf %23 : vector<16x128xf32> to vector<16x128xbf16>
    %c0_18 = arith.constant 0 : index
    %c0_19 = arith.constant 0 : index
    %25 = vector.load %arg8[%c0_18, %c0_19] : memref<128x128xbf16, #tpu.memory_space<vmem>>, vector<128x128xbf16>
    %cst_20 = arith.constant dense<0.000000e+00> : vector<16x128xf32>
    %26 = tpu.matmul %24, %25, %cst_20 {dimension_numbers = #tpu.dot_dimension_numbers<[1], [0], [0], [1], [0, 0, 1, 1], [], []>} : vector<16x128xbf16>, vector<128x128xbf16>, vector<16x128xf32> -> vector<16x128xf32>
    %c0_21 = arith.constant 0 : index
    %c0_22 = arith.constant 0 : index
    %27 = vector.load %arg9[%c0_21, %c0_22] : memref<1x128xf32, #tpu.memory_space<vmem>>, vector<1x128xf32>
    %28 = vector.broadcast %27 : vector<1x128xf32> to vector<16x128xf32>
    %29 = arith.addf %26, %28 : vector<16x128xf32>
    %cst_23 = arith.constant 0.000000e+00 : f32
    %30 = vector.broadcast %cst_23 : f32 to vector<16x128xf32>
    %31 = arith.maximumf %29, %30 : vector<16x128xf32>
    %32 = arith.truncf %31 : vector<16x128xf32> to vector<16x128xbf16>
    %c0_24 = arith.constant 0 : index
    %c0_25 = arith.constant 0 : index
    %33 = vector.load %arg10[%c0_24, %c0_25] : memref<128x256xbf16, #tpu.memory_space<vmem>>, vector<128x256xbf16>
    %cst_26 = arith.constant dense<0.000000e+00> : vector<16x256xf32>
    %34 = tpu.matmul %32, %33, %cst_26 {dimension_numbers = #tpu.dot_dimension_numbers<[1], [0], [0], [1], [0, 0, 1, 1], [], []>} : vector<16x128xbf16>, vector<128x256xbf16>, vector<16x256xf32> -> vector<16x256xf32>
    %c0_27 = arith.constant 0 : index
    %c0_28 = arith.constant 0 : index
    %35 = vector.load %arg11[%c0_27, %c0_28] : memref<1x256xf32, #tpu.memory_space<vmem>>, vector<1x256xf32>
    %36 = vector.broadcast %35 : vector<1x256xf32> to vector<16x256xf32>
    %37 = arith.addf %34, %36 : vector<16x256xf32>
    %cst_29 = arith.constant 0.000000e+00 : f32
    %38 = vector.broadcast %cst_29 : f32 to vector<16x256xf32>
    %39 = arith.maximumf %37, %38 : vector<16x256xf32>
    %40 = arith.truncf %39 : vector<16x256xf32> to vector<16x256xbf16>
    %c0_30 = arith.constant 0 : index
    %c0_31 = arith.constant 0 : index
    %41 = vector.load %arg12[%c0_30, %c0_31] : memref<256x896xbf16, #tpu.memory_space<vmem>>, vector<256x896xbf16>
    %cst_32 = arith.constant dense<0.000000e+00> : vector<16x896xf32>
    %42 = tpu.matmul %40, %41, %cst_32 {dimension_numbers = #tpu.dot_dimension_numbers<[1], [0], [0], [1], [0, 0, 1, 1], [], []>} : vector<16x256xbf16>, vector<256x896xbf16>, vector<16x896xf32> -> vector<16x896xf32>
    %c0_33 = arith.constant 0 : index
    %c0_34 = arith.constant 0 : index
    %43 = vector.load %arg13[%c0_33, %c0_34] : memref<1x896xf32, #tpu.memory_space<vmem>>, vector<1x896xf32>
    %44 = vector.broadcast %43 : vector<1x896xf32> to vector<16x896xf32>
    %45 = arith.addf %42, %44 : vector<16x896xf32>
    %cst_35 = arith.constant 0.000000e+00 : f32
    %46 = vector.broadcast %cst_35 : f32 to vector<16x896xf32>
    %47 = arith.subf %46, %45 : vector<16x896xf32>
    %48 = math.exp %47 : vector<16x896xf32>
    %cst_36 = arith.constant 1.000000e+00 : f32
    %49 = vector.broadcast %cst_36 : f32 to vector<16x896xf32>
    %50 = arith.addf %49, %48 : vector<16x896xf32>
    %51 = tpu.reciprocal %50 {approx = true} : vector<16x896xf32> -> vector<16x896xf32>
    %c0_37 = arith.constant 0 : index
    %c0_38 = arith.constant 0 : index
    %52 = vector.load %arg14[%c0_37, %c0_38] : memref<16x896xf32, #tpu.memory_space<vmem>>, vector<16x896xf32>
    tpu.vector_store %arg14[%c0_37, %c0_38], %51 {strides = array<i32>} : memref<16x896xf32, #tpu.memory_space<vmem>>, vector<16x896xf32>,
    return
  }
  func.func @transform_0(%arg0: i32) -> (i32, i32) {
    %c0_i32 = arith.constant 0 : i32
    %c0_i32_0 = arith.constant 0 : i32
    return %arg0, %c0_i32 : i32, i32
  }
  func.func @transform_1(%arg0: i32) -> (i32, i32) {
    %c0_i32 = arith.constant 0 : i32
    %c0_i32_0 = arith.constant 0 : i32
    %c0_i32_1 = arith.constant 0 : i32
    return %c0_i32, %c0_i32_0 : i32, i32
  }
  func.func @transform_2(%arg0: i32) -> (i32, i32) {
    %c0_i32 = arith.constant 0 : i32
    %c0_i32_0 = arith.constant 0 : i32
    %c0_i32_1 = arith.constant 0 : i32
    return %c0_i32, %c0_i32_0 : i32, i32
  }
  func.func @transform_3(%arg0: i32) -> (i32, i32) {
    %c0_i32 = arith.constant 0 : i32
    %c0_i32_0 = arith.constant 0 : i32
    %c0_i32_1 = arith.constant 0 : i32
    return %c0_i32, %c0_i32_0 : i32, i32
  }
  func.func @transform_4(%arg0: i32) -> (i32, i32) {
    %c0_i32 = arith.constant 0 : i32
    %c0_i32_0 = arith.constant 0 : i32
    %c0_i32_1 = arith.constant 0 : i32
    return %c0_i32, %c0_i32_0 : i32, i32
  }
  func.func @transform_5(%arg0: i32) -> (i32, i32) {
    %c0_i32 = arith.constant 0 : i32
    %c0_i32_0 = arith.constant 0 : i32
    %c0_i32_1 = arith.constant 0 : i32
    return %c0_i32, %c0_i32_0 : i32, i32
  }
  func.func @transform_6(%arg0: i32) -> (i32, i32) {
    %c0_i32 = arith.constant 0 : i32
    %c0_i32_0 = arith.constant 0 : i32
    %c0_i32_1 = arith.constant 0 : i32
    return %c0_i32, %c0_i32_0 : i32, i32
  }
  func.func @transform_7(%arg0: i32) -> (i32, i32) {
    %c0_i32 = arith.constant 0 : i32
    %c0_i32_0 = arith.constant 0 : i32
    %c0_i32_1 = arith.constant 0 : i32
    return %c0_i32, %c0_i32_0 : i32, i32
  }
  func.func @transform_8(%arg0: i32) -> (i32, i32) {
    %c0_i32 = arith.constant 0 : i32
    %c0_i32_0 = arith.constant 0 : i32
    %c0_i32_1 = arith.constant 0 : i32
    return %c0_i32, %c0_i32_0 : i32, i32
  }
  func.func @transform_9(%arg0: i32) -> (i32, i32) {
    %c0_i32 = arith.constant 0 : i32
    %c0_i32_0 = arith.constant 0 : i32
    %c0_i32_1 = arith.constant 0 : i32
    return %c0_i32, %c0_i32_0 : i32, i32
  }
  func.func @transform_10(%arg0: i32) -> (i32, i32) {
    %c0_i32 = arith.constant 0 : i32
    %c0_i32_0 = arith.constant 0 : i32
    %c0_i32_1 = arith.constant 0 : i32
    return %c0_i32, %c0_i32_0 : i32, i32
  }
  func.func @transform_11(%arg0: i32) -> (i32, i32) {
    %c0_i32 = arith.constant 0 : i32
    %c0_i32_0 = arith.constant 0 : i32
    %c0_i32_1 = arith.constant 0 : i32
    return %c0_i32, %c0_i32_0 : i32, i32
  }
  func.func @transform_12(%arg0: i32) -> (i32, i32) {
    %c0_i32 = arith.constant 0 : i32
    %c0_i32_0 = arith.constant 0 : i32
    %c0_i32_1 = arith.constant 0 : i32
    return %c0_i32, %c0_i32_0 : i32, i32
  }
  func.func @transform_13(%arg0: i32) -> (i32, i32) {
    %c0_i32 = arith.constant 0 : i32
    %c0_i32_0 = arith.constant 0 : i32
    return %arg0, %c0_i32 : i32, i32
  }
}

</mosaic_0001>

<llo_original>
// kernel: autoencoder_forward.1
$region0: #{autoencoder_forward.1}
  #allocation0 [shape = 'u32[]', space=smem, size = 0x4, offset = 0x4, fixed_abs, tag = 'smem constant byte address 0x4 - core index']
  #allocation1 [shape = 'u32[144,128]{1,0:T(1,128)}', space=vmem, size = 0x12000, scoped, tag = 'internal scratch']
  %s0 = inlined_call_operand.vmem [shape: bf16[16,896], index: 0, kind: input, shape index: {}]
  %s1 = inlined_call_operand.hbm [shape: bf16[896,256], index: 1, kind: input, shape index: {}]
  %s2 = inlined_call_operand.vmem [shape: f32[1,256], index: 2, kind: input, shape index: {}]
  %s3 = inlined_call_operand.vmem [shape: bf16[256,128], index: 3, kind: input, shape index: {}]
  %s4 = inlined_call_operand.vmem [shape: f32[1,128], index: 4, kind: input, shape index: {}]
  %s5 = inlined_call_operand.hbm [shape: bf16[128,128], index: 5, kind: input, shape index: {}]
  %s6 = inlined_call_operand.vmem [shape: f32[1,128], index: 6, kind: input, shape index: {}]
  %s7 = inlined_call_operand.hbm [shape: bf16[128,128], index: 7, kind: input, shape index: {}]
  %s8 = inlined_call_operand.vmem [shape: f32[1,128], index: 8, kind: input, shape index: {}]
  %s9 = inlined_call_operand.hbm [shape: bf16[128,256], index: 9, kind: input, shape index: {}]
  %s10 = inlined_call_operand.vmem [shape: f32[1,256], index: 10, kind: input, shape index: {}]
  %s11 = inlined_call_operand.hbm [shape: bf16[256,896], index: 11, kind: input, shape index: {}]
  %s12 = inlined_call_operand.vmem [shape: f32[1,896], index: 12, kind: input, shape index: {}]
  %s13 = inlined_call_operand.vmem [shape: f32[16,896], index: 13, kind: output, shape index: {}]
  %s14 = sld [smem:[#allocation0]]
  $region82: #{autoencoder_forward.1} parent=0
    _
  %s16 = ssub.s32 1, %s14
  %s17 = scalar_select 0, %s16, %s14
  $region1: #{autoencoder_forward.1} parent=0
    #allocation2 [shape = 'u8[458752]{0}', space=vmem, size = 0x70000, scoped, tag = 'input window, operand 1, single buffered']
    #allocation3 [shape = 's32[1]{0}', space=sflag, size = 0x4, scoped, tag = 'scoped memory for autoencoder_forward.1']
    #allocation4 [shape = 'u8[32768]{0}', space=vmem, size = 0x8000, scoped, tag = 'input window, operand 5, single buffered']
    #allocation5 [shape = 's32[1]{0}', space=sflag, size = 0x4, scoped, tag = 'scoped memory for autoencoder_forward.1']
    #allocation6 [shape = 'u8[32768]{0}', space=vmem, size = 0x8000, scoped, tag = 'input window, operand 7, single buffered']
    #allocation7 [shape = 'u8[65536]{0}', space=vmem, size = 0x10000, scoped, tag = 'input window, operand 9, single buffered']
    #allocation8 [shape = 's32[1]{0}', space=sflag, size = 0x4, scoped, tag = 'scoped memory for autoencoder_forward.1']
    #allocation9 [shape = 'u8[458752]{0}', space=vmem, size = 0x70000, scoped, tag = 'input window, operand 11, single buffered']
    %18 = vsyncpa [#allocation3], 0
    %19 = vsyncpa [#allocation5], 0
    %20 = vsyncpa [#allocation8], 0
    // Predicated region
    $region2: #{autoencoder_forward.1} parent=1 // pred_check
      _
    $region3: #{autoencoder_forward.1} parent=1 // pred_check_branch
      %22 = sbr.rel (0) target = $region5
    $region4: #{autoencoder_forward.1} parent=1 // pred_region
      _
    $region5: #{autoencoder_forward.1} parent=1 // pred_fallthru
      _
    // Predicated region
    $region6: #{autoencoder_forward.1} parent=1 // pred_check
      _
    $region7: #{autoencoder_forward.1} parent=1 // pred_check_branch
      %24 = sbr.rel (0) target = $region9
    $region8: #{autoencoder_forward.1} parent=1 // pred_region
      %s26 = ssub.s32 14336, 14336
      %27 = vsyncadd [#allocation3], %s26
      %s28 = sshll.u32 [#allocation2], 4
      %s29 = int_to_ptr.vmem [resolvable:$true] %s28
      %34 = dma.hbm_to_vmem [thread:$0]  %s1, 14336, %s29, [#allocation3], 128, 128, 8
    $region9: #{autoencoder_forward.1} parent=1 // pred_fallthru
      _
    // Predicated region
    $region10: #{autoencoder_forward.1} parent=1 // pred_check
      _
    $region11: #{autoencoder_forward.1} parent=1 // pred_check_branch
      %36 = sbr.rel (0) target = $region13
    $region12: #{autoencoder_forward.1} parent=1 // pred_region
      _
    $region13: #{autoencoder_forward.1} parent=1 // pred_fallthru
      _
    // Predicated region
    $region14: #{autoencoder_forward.1} parent=1 // pred_check
      _
    $region15: #{autoencoder_forward.1} parent=1 // pred_check_branch
      %38 = sbr.rel (0) target = $region17
    $region16: #{autoencoder_forward.1} parent=1 // pred_region
      _
    $region17: #{autoencoder_forward.1} parent=1 // pred_fallthru
      _
    // Predicated region
    $region18: #{autoencoder_forward.1} parent=1 // pred_check
      _
    $region19: #{autoencoder_forward.1} parent=1 // pred_check_branch
      %40 = sbr.rel (0) target = $region21
    $region20: #{autoencoder_forward.1} parent=1 // pred_region
      _
    $region21: #{autoencoder_forward.1} parent=1 // pred_fallthru
      _
    // Predicated region
    $region22: #{autoencoder_forward.1} parent=1 // pred_check
      _
    $region23: #{autoencoder_forward.1} parent=1 // pred_check_branch
      %42 = sbr.rel (0) target = $region25
    $region24: #{autoencoder_forward.1} parent=1 // pred_region
      %s44 = ssub.s32 1024, 1024
      %45 = vsyncadd [#allocation5], %s44
      %s46 = sshll.u32 [#allocation4], 4
      %s47 = int_to_ptr.vmem [resolvable:$true] %s46
      %52 = dma.hbm_to_vmem [thread:$0]  %s5, 1024, %s47, [#allocation5], 64, 64, 4
    $region25: #{autoencoder_forward.1} parent=1 // pred_fallthru
      _
    // Predicated region
    $region26: #{autoencoder_forward.1} parent=1 // pred_check
      _
    $region27: #{autoencoder_forward.1} parent=1 // pred_check_branch
      %54 = sbr.rel (0) target = $region29
    $region28: #{autoencoder_forward.1} parent=1 // pred_region
      _
    $region29: #{autoencoder_forward.1} parent=1 // pred_fallthru
      _
    // Predicated region
    $region30: #{autoencoder_forward.1} parent=1 // pred_check
      _
    $region31: #{autoencoder_forward.1} parent=1 // pred_check_branch
      %56 = sbr.rel (0) target = $region33
    $region32: #{autoencoder_forward.1} parent=1 // pred_region
      %s58 = ssub.s32 1024, 1024
      %59 = vsyncadd [#allocation5], %s58
      %s60 = sshll.u32 [#allocation6], 4
      %s61 = int_to_ptr.vmem [resolvable:$true] %s60
      %66 = dma.hbm_to_vmem [thread:$0]  %s7, 1024, %s61, [#allocation5], 64, 64, 4
    $region33: #{autoencoder_forward.1} parent=1 // pred_fallthru
      _
    // Predicated region
    $region34: #{autoencoder_forward.1} parent=1 // pred_check
      _
    $region35: #{autoencoder_forward.1} parent=1 // pred_check_branch
      %68 = sbr.rel (0) target = $region37
    $region36: #{autoencoder_forward.1} parent=1 // pred_region
      _
    $region37: #{autoencoder_forward.1} parent=1 // pred_fallthru
      _
    // Predicated region
    $region38: #{autoencoder_forward.1} parent=1 // pred_check
      _
    $region39: #{autoencoder_forward.1} parent=1 // pred_check_branch
      %70 = sbr.rel (0) target = $region41
    $region40: #{autoencoder_forward.1} parent=1 // pred_region
      %s72 = ssub.s32 2048, 2048
      %73 = vsyncadd [#allocation8], %s72
      %s74 = sshll.u32 [#allocation7], 4
      %s75 = int_to_ptr.vmem [resolvable:$true] %s74
      %80 = dma.hbm_to_vmem [thread:$0]  %s9, 2048, %s75, [#allocation8], 128, 128, 8
    $region41: #{autoencoder_forward.1} parent=1 // pred_fallthru
      _
    // Predicated region
    $region42: #{autoencoder_forward.1} parent=1 // pred_check
      _
    $region43: #{autoencoder_forward.1} parent=1 // pred_check_branch
      %82 = sbr.rel (0) target = $region45
    $region44: #{autoencoder_forward.1} parent=1 // pred_region
      _
    $region45: #{autoencoder_forward.1} parent=1 // pred_fallthru
      _
    // Predicated region
    $region46: #{autoencoder_forward.1} parent=1 // pred_check
      _
    $region47: #{autoencoder_forward.1} parent=1 // pred_check_branch
      %84 = sbr.rel (0) target = $region49
    $region48: #{autoencoder_forward.1} parent=1 // pred_region
      %s86 = ssub.s32 14336, 14336
      %87 = vsyncadd [#allocation8], %s86
      %s88 = sshll.u32 [#allocation9], 4
      %s89 = int_to_ptr.vmem [resolvable:$true] %s88
      %94 = dma.hbm_to_vmem [thread:$0]  %s11, 14336, %s89, [#allocation8], 448, 448, 28
    $region49: #{autoencoder_forward.1} parent=1 // pred_fallthru
      _
    // Predicated region
    $region50: #{autoencoder_forward.1} parent=1 // pred_check
      _
    $region51: #{autoencoder_forward.1} parent=1 // pred_check_branch
      %96 = sbr.rel (0) target = $region53
    $region52: #{autoencoder_forward.1} parent=1 // pred_region
      _
    $region53: #{autoencoder_forward.1} parent=1 // pred_fallthru
      _
    // Predicated region
    $region54: #{autoencoder_forward.1} parent=1 // pred_check
      _
    $region55: #{autoencoder_forward.1} parent=1 // pred_check_branch
      %98 = sbr.rel (0) target = $region57
    $region56: #{autoencoder_forward.1} parent=1 // pred_region
      %99 = dma.done [#allocation3], 14336
    $region57: #{autoencoder_forward.1} parent=1 // pred_fallthru
      _
    // Predicated region
    $region58: #{autoencoder_forward.1} parent=1 // pred_check
      _
    $region59: #{autoencoder_forward.1} parent=1 // pred_check_branch
      %101 = sbr.rel (0) target = $region61
    $region60: #{autoencoder_forward.1} parent=1 // pred_region
      %102 = dma.done [#allocation5], 1024
    $region61: #{autoencoder_forward.1} parent=1 // pred_fallthru
      _
    // Predicated region
    $region62: #{autoencoder_forward.1} parent=1 // pred_check
      _
    $region63: #{autoencoder_forward.1} parent=1 // pred_check_branch
      %104 = sbr.rel (0) target = $region65
    $region64: #{autoencoder_forward.1} parent=1 // pred_region
      %105 = dma.done [#allocation5], 1024
    $region65: #{autoencoder_forward.1} parent=1 // pred_fallthru
      _
    // Predicated region
    $region66: #{autoencoder_forward.1} parent=1 // pred_check
      _
    $region67: #{autoencoder_forward.1} parent=1 // pred_check_branch
      %107 = sbr.rel (0) target = $region69
    $region68: #{autoencoder_forward.1} parent=1 // pred_region
      %108 = dma.done [#allocation8], 2048
    $region69: #{autoencoder_forward.1} parent=1 // pred_fallthru
      _
    // Predicated region
    $region70: #{autoencoder_forward.1} parent=1 // pred_check
      _
    $region71: #{autoencoder_forward.1} parent=1 // pred_check_branch
      %110 = sbr.rel (0) target = $region73
    $region72: #{autoencoder_forward.1} parent=1 // pred_region
      %111 = dma.done [#allocation8], 14336
    $region73: #{autoencoder_forward.1} parent=1 // pred_fallthru
      _
    %v113 = vld [vmem:[%s0] sm:$0xff]
    %v114 = vld [vmem:[%s0 + $0x8] sm:$0xff]
    %v115 = vld [vmem:[%s0 + $0x10] sm:$0xff]
    %v116 = vld [vmem:[%s0 + $0x18] sm:$0xf]
    %v117 = vld [vmem:[%s0 + $0x1c] sm:$0xff]
    %v118 = vld [vmem:[%s0 + $0x24] sm:$0xff]
    %v119 = vld [vmem:[%s0 + $0x2c] sm:$0xff]
    %v120 = vld [vmem:[%s0 + $0x34] sm:$0xf]
    %v121 = vld [vmem:[#allocation2] sm:$0xff]
    %v122 = vld [vmem:[#allocation2 + $0x8] sm:$0xff]
    %v123 = vld [vmem:[#allocation2 + $0x10] sm:$0xff]
    %v124 = vld [vmem:[#allocation2 + $0x18] sm:$0xff]
    %v125 = vld [vmem:[#allocation2 + $0x20] sm:$0xff]
    %v126 = vld [vmem:[#allocation2 + $0x28] sm:$0xff]
    %v127 = vld [vmem:[#allocation2 + $0x30] sm:$0xff]
    %v128 = vld [vmem:[#allocation2 + $0x38] sm:$0xff]
    %v129 = vld [vmem:[#allocation2 + $0x40] sm:$0xff]
    %v130 = vld [vmem:[#allocation2 + $0x48] sm:$0xff]
    %v131 = vld [vmem:[#allocation2 + $0x50] sm:$0xff]
    %v132 = vld [vmem:[#allocation2 + $0x58] sm:$0xff]
    %v133 = vld [vmem:[#allocation2 + $0x60] sm:$0xff]
    %v134 = vld [vmem:[#allocation2 + $0x68] sm:$0xff]
    %v135 = vld [vmem:[#allocation2 + $0x70] sm:$0xff]
    %v136 = vld [vmem:[#allocation2 + $0x78] sm:$0xff]
    %v137 = vld [vmem:[#allocation2 + $0x80] sm:$0xff]
    %v138 = vld [vmem:[#allocation2 + $0x88] sm:$0xff]
    %v139 = vld [vmem:[#allocation2 + $0x90] sm:$0xff]
    %v140 = vld [vmem:[#allocation2 + $0x98] sm:$0xff]
    %v141 = vld [vmem:[#allocation2 + $0xa0] sm:$0xff]
    %v142 = vld [vmem:[#allocation2 + $0xa8] sm:$0xff]
    %v143 = vld [vmem:[#allocation2 + $0xb0] sm:$0xff]
    %v144 = vld [vmem:[#allocation2 + $0xb8] sm:$0xff]
    %v145 = vld [vmem:[#allocation2 + $0xc0] sm:$0xff]
    %v146 = vld [vmem:[#allocation2 + $0xc8] sm:$0xff]
    %v147 = vld [vmem:[#allocation2 + $0xd0] sm:$0xff]
    %v148 = vld [vmem:[#allocation2 + $0xd8] sm:$0xff]
    %v149 = vld [vmem:[#allocation2 + $0xe0] sm:$0xff]
    %v150 = vld [vmem:[#allocation2 + $0xe8] sm:$0xff]
    %v151 = vld [vmem:[#allocation2 + $0xf0] sm:$0xff]
    %v152 = vld [vmem:[#allocation2 + $0xf8] sm:$0xff]
    %v153 = vld [vmem:[#allocation2 + $0x100] sm:$0xff]
    %v154 = vld [vmem:[#allocation2 + $0x108] sm:$0xff]
    %v155 = vld [vmem:[#allocation2 + $0x110] sm:$0xff]
    %v156 = vld [vmem:[#allocation2 + $0x118] sm:$0xff]
    %v157 = vld [vmem:[#allocation2 + $0x120] sm:$0xff]
    %v158 = vld [vmem:[#allocation2 + $0x128] sm:$0xff]
    %v159 = vld [vmem:[#allocation2 + $0x130] sm:$0xff]
    %v160 = vld [vmem:[#allocation2 + $0x138] sm:$0xff]
    %v161 = vld [vmem:[#allocation2 + $0x140] sm:$0xff]
    %v162 = vld [vmem:[#allocation2 + $0x148] sm:$0xff]
    %v163 = vld [vmem:[#allocation2 + $0x150] sm:$0xff]
    %v164 = vld [vmem:[#allocation2 + $0x158] sm:$0xff]
    %v165 = vld [vmem:[#allocation2 + $0x160] sm:$0xff]
    %v166 = vld [vmem:[#allocation2 + $0x168] sm:$0xff]
    %v167 = vld [vmem:[#allocation2 + $0x170] sm:$0xff]
    %v168 = vld [vmem:[#allocation2 + $0x178] sm:$0xff]
    %v169 = vld [vmem:[#allocation2 + $0x180] sm:$0xff]
    %v170 = vld [vmem:[#allocation2 + $0x188] sm:$0xff]
    %v171 = vld [vmem:[#allocation2 + $0x190] sm:$0xff]
    %v172 = vld [vmem:[#allocation2 + $0x198] sm:$0xff]
    %v173 = vld [vmem:[#allocation2 + $0x1a0] sm:$0xff]
    %v174 = vld [vmem:[#allocation2 + $0x1a8] sm:$0xff]
    %v175 = vld [vmem:[#allocation2 + $0x1b0] sm:$0xff]
    %v176 = vld [vmem:[#allocation2 + $0x1b8] sm:$0xff]
    %v177 = vld [vmem:[#allocation2 + $0x1c0] sm:$0xff]
    %v178 = vld [vmem:[#allocation2 + $0x1c8] sm:$0xff]
    %v179 = vld [vmem:[#allocation2 + $0x1d0] sm:$0xff]
    %v180 = vld [vmem:[#allocation2 + $0x1d8] sm:$0xff]
    %v181 = vld [vmem:[#allocation2 + $0x1e0] sm:$0xff]
    %v182 = vld [vmem:[#allocation2 + $0x1e8] sm:$0xff]
    %v183 = vld [vmem:[#allocation2 + $0x1f0] sm:$0xff]
    %v184 = vld [vmem:[#allocation2 + $0x1f8] sm:$0xff]
    %v185 = vld [vmem:[#allocation2 + $0x200] sm:$0xff]
    %v186 = vld [vmem:[#allocation2 + $0x208] sm:$0xff]
    %v187 = vld [vmem:[#allocation2 + $0x210] sm:$0xff]
    %v188 = vld [vmem:[#allocation2 + $0x218] sm:$0xff]
    %v189 = vld [vmem:[#allocation2 + $0x220] sm:$0xff]
    %v190 = vld [vmem:[#allocation2 + $0x228] sm:$0xff]
    %v191 = vld [vmem:[#allocation2 + $0x230] sm:$0xff]
    %v192 = vld [vmem:[#allocation2 + $0x238] sm:$0xff]
    %v193 = vld [vmem:[#allocation2 + $0x240] sm:$0xff]
    %v194 = vld [vmem:[#allocation2 + $0x248] sm:$0xff]
    %v195 = vld [vmem:[#allocation2 + $0x250] sm:$0xff]
    %v196 = vld [vmem:[#allocation2 + $0x258] sm:$0xff]
    %v197 = vld [vmem:[#allocation2 + $0x260] sm:$0xff]
    %v198 = vld [vmem:[#allocation2 + $0x268] sm:$0xff]
    %v199 = vld [vmem:[#allocation2 + $0x270] sm:$0xff]
    %v200 = vld [vmem:[#allocation2 + $0x278] sm:$0xff]
    %v201 = vld [vmem:[#allocation2 + $0x280] sm:$0xff]
    %v202 = vld [vmem:[#allocation2 + $0x288] sm:$0xff]
    %v203 = vld [vmem:[#allocation2 + $0x290] sm:$0xff]
    %v204 = vld [vmem:[#allocation2 + $0x298] sm:$0xff]
    %v205 = vld [vmem:[#allocation2 + $0x2a0] sm:$0xff]
    %v206 = vld [vmem:[#allocation2 + $0x2a8] sm:$0xff]
    %v207 = vld [vmem:[#allocation2 + $0x2b0] sm:$0xff]
    %v208 = vld [vmem:[#allocation2 + $0x2b8] sm:$0xff]
    %v209 = vld [vmem:[#allocation2 + $0x2c0] sm:$0xff]
    %v210 = vld [vmem:[#allocation2 + $0x2c8] sm:$0xff]
    %v211 = vld [vmem:[#allocation2 + $0x2d0] sm:$0xff]
    %v212 = vld [vmem:[#allocation2 + $0x2d8] sm:$0xff]
    %v213 = vld [vmem:[#allocation2 + $0x2e0] sm:$0xff]
    %v214 = vld [vmem:[#allocation2 + $0x2e8] sm:$0xff]
    %v215 = vld [vmem:[#allocation2 + $0x2f0] sm:$0xff]
    %v216 = vld [vmem:[#allocation2 + $0x2f8] sm:$0xff]
    %v217 = vld [vmem:[#allocation2 + $0x300] sm:$0xff]
    %v218 = vld [vmem:[#allocation2 + $0x308] sm:$0xff]
    %v219 = vld [vmem:[#allocation2 + $0x310] sm:$0xff]
    %v220 = vld [vmem:[#allocation2 + $0x318] sm:$0xff]
    %v221 = vld [vmem:[#allocation2 + $0x320] sm:$0xff]
    %v222 = vld [vmem:[#allocation2 + $0x328] sm:$0xff]
    %v223 = vld [vmem:[#allocation2 + $0x330] sm:$0xff]
    %v224 = vld [vmem:[#allocation2 + $0x338] sm:$0xff]
    %v225 = vld [vmem:[#allocation2 + $0x340] sm:$0xff]
    %v226 = vld [vmem:[#allocation2 + $0x348] sm:$0xff]
    %v227 = vld [vmem:[#allocation2 + $0x350] sm:$0xff]
    %v228 = vld [vmem:[#allocation2 + $0x358] sm:$0xff]
    %v229 = vld [vmem:[#allocation2 + $0x360] sm:$0xff]
    %v230 = vld [vmem:[#allocation2 + $0x368] sm:$0xff]
    %v231 = vld [vmem:[#allocation2 + $0x370] sm:$0xff]
    %v232 = vld [vmem:[#allocation2 + $0x378] sm:$0xff]
    %v233 = vld [vmem:[%s2] sm:$0x3]
    %v235 = vlaneseq
    %v236 = vshrl.u32 %v235, 7
    %v237 = vsub.s32 0, %v236
    %v238 = vrot.slane %v233, %v237
    %v239 = vlaneseq
    %v240 = vshrl.u32 %v239, 7
    %v241 = vsub.s32 1, %v240
    %v242 = vrot.slane %v233, %v241
    %v253 = vunpack.c.l.b16 %v113
    %v254 = vunpack.c.h.b16 %v113
    %v255 = vunpack.c.l.b16 %v114
    %v256 = vunpack.c.h.b16 %v114
    %v257 = vunpack.c.l.b16 %v115
    %v258 = vunpack.c.h.b16 %v115
    %v259 = vunpack.c.l.b16 %v116
    %v260 = vunpack.c.l.b16 %v117
    %v261 = vunpack.c.h.b16 %v117
    %v262 = vunpack.c.l.b16 %v118
    %v263 = vunpack.c.h.b16 %v118
    %v264 = vunpack.c.l.b16 %v119
    %v265 = vunpack.c.h.b16 %v119
    %v266 = vunpack.c.l.b16 %v120
    %v267 = vpack.c.b16 %v260, %v253
    %v268 = vpack.c.b16 %v261, %v254
    %v269 = vpack.c.b16 %v262, %v255
    %v270 = vpack.c.b16 %v263, %v256
    %v271 = vpack.c.b16 %v264, %v257
    %v272 = vpack.c.b16 %v265, %v258
    %v273 = vpack.c.b16 %v266, %v259
    %v393 = vunpack.c.l.b16 %v121
    %v394 = vunpack.c.h.b16 %v121
    %v395 = vunpack.c.l.b16 %v122
    %v396 = vunpack.c.h.b16 %v122
    %v397 = vunpack.c.l.b16 %v123
    %v398 = vunpack.c.h.b16 %v123
    %v399 = vunpack.c.l.b16 %v124
    %v400 = vunpack.c.h.b16 %v124
    %v401 = vunpack.c.l.b16 %v125
    %v402 = vunpack.c.h.b16 %v125
    %v403 = vunpack.c.l.b16 %v126
    %v404 = vunpack.c.h.b16 %v126
    %v405 = vunpack.c.l.b16 %v127
    %v406 = vunpack.c.h.b16 %v127
    %v407 = vunpack.c.l.b16 %v128
    %v408 = vunpack.c.h.b16 %v128
    %v409 = vunpack.c.l.b16 %v129
    %v410 = vunpack.c.h.b16 %v129
    %v411 = vunpack.c.l.b16 %v130
    %v412 = vunpack.c.h.b16 %v130
    %v413 = vunpack.c.l.b16 %v131
    %v414 = vunpack.c.h.b16 %v131
    %v415 = vunpack.c.l.b16 %v132
    %v416 = vunpack.c.h.b16 %v132
    %v417 = vunpack.c.l.b16 %v133
    %v418 = vunpack.c.h.b16 %v133
    %v419 = vunpack.c.l.b16 %v134
    %v420 = vunpack.c.h.b16 %v134
    %v421 = vunpack.c.l.b16 %v135
    %v422 = vunpack.c.h.b16 %v135
    %v423 = vunpack.c.l.b16 %v136
    %v424 = vunpack.c.h.b16 %v136
    %v425 = vunpack.c.l.b16 %v137
    %v426 = vunpack.c.h.b16 %v137
    %v427 = vunpack.c.l.b16 %v138
    %v428 = vunpack.c.h.b16 %v138
    %v429 = vunpack.c.l.b16 %v139
    %v430 = vunpack.c.h.b16 %v139
    %v431 = vunpack.c.l.b16 %v140
    %v432 = vunpack.c.h.b16 %v140
    %v433 = vunpack.c.l.b16 %v141
    %v434 = vunpack.c.h.b16 %v141
    %v435 = vunpack.c.l.b16 %v142
    %v436 = vunpack.c.h.b16 %v142
    %v437 = vunpack.c.l.b16 %v143
    %v438 = vunpack.c.h.b16 %v143
    %v439 = vunpack.c.l.b16 %v144
    %v440 = vunpack.c.h.b16 %v144
    %v441 = vunpack.c.l.b16 %v145
    %v442 = vunpack.c.h.b16 %v145
    %v443 = vunpack.c.l.b16 %v146
    %v444 = vunpack.c.h.b16 %v146
    %v445 = vunpack.c.l.b16 %v147
    %v446 = vunpack.c.h.b16 %v147
    %v447 = vunpack.c.l.b16 %v148
    %v448 = vunpack.c.h.b16 %v148
    %v449 = vunpack.c.l.b16 %v149
    %v450 = vunpack.c.h.b16 %v149
    %v451 = vunpack.c.l.b16 %v150
    %v452 = vunpack.c.h.b16 %v150
    %v453 = vunpack.c.l.b16 %v151
    %v454 = vunpack.c.h.b16 %v151
    %v455 = vunpack.c.l.b16 %v152
    %v456 = vunpack.c.h.b16 %v152
    %v457 = vunpack.c.l.b16 %v153
    %v458 = vunpack.c.h.b16 %v153
    %v459 = vunpack.c.l.b16 %v154
    %v460 = vunpack.c.h.b16 %v154
    %v461 = vunpack.c.l.b16 %v155
    %v462 = vunpack.c.h.b16 %v155
    %v463 = vunpack.c.l.b16 %v156
    %v464 = vunpack.c.h.b16 %v156
    %v465 = vunpack.c.l.b16 %v157
    %v466 = vunpack.c.h.b16 %v157
    %v467 = vunpack.c.l.b16 %v158
    %v468 = vunpack.c.h.b16 %v158
    %v469 = vunpack.c.l.b16 %v159
    %v470 = vunpack.c.h.b16 %v159
    %v471 = vunpack.c.l.b16 %v160
    %v472 = vunpack.c.h.b16 %v160
    %v473 = vunpack.c.l.b16 %v161
    %v474 = vunpack.c.h.b16 %v161
    %v475 = vunpack.c.l.b16 %v162
    %v476 = vunpack.c.h.b16 %v162
    %v477 = vunpack.c.l.b16 %v163
    %v478 = vunpack.c.h.b16 %v163
    %v479 = vunpack.c.l.b16 %v164
    %v480 = vunpack.c.h.b16 %v164
    %v481 = vunpack.c.l.b16 %v165
    %v482 = vunpack.c.h.b16 %v165
    %v483 = vunpack.c.l.b16 %v166
    %v484 = vunpack.c.h.b16 %v166
    %v485 = vunpack.c.l.b16 %v167
    %v486 = vunpack.c.h.b16 %v167
    %v487 = vunpack.c.l.b16 %v168
    %v488 = vunpack.c.h.b16 %v168
    %v489 = vunpack.c.l.b16 %v169
    %v490 = vunpack.c.h.b16 %v169
    %v491 = vunpack.c.l.b16 %v170
    %v492 = vunpack.c.h.b16 %v170
    %v493 = vunpack.c.l.b16 %v171
    %v494 = vunpack.c.h.b16 %v171
    %v495 = vunpack.c.l.b16 %v172
    %v496 = vunpack.c.h.b16 %v172
    %v497 = vunpack.c.l.b16 %v173
    %v498 = vunpack.c.h.b16 %v173
    %v499 = vunpack.c.l.b16 %v174
    %v500 = vunpack.c.h.b16 %v174
    %v501 = vunpack.c.l.b16 %v175
    %v502 = vunpack.c.h.b16 %v175
    %v503 = vunpack.c.l.b16 %v176
    %v504 = vunpack.c.h.b16 %v176
    %v505 = vunpack.c.l.b16 %v177
    %v506 = vunpack.c.h.b16 %v177
    %v507 = vunpack.c.l.b16 %v178
    %v508 = vunpack.c.h.b16 %v178
    %v509 = vunpack.c.l.b16 %v179
    %v510 = vunpack.c.h.b16 %v179
    %v511 = vunpack.c.l.b16 %v180
    %v512 = vunpack.c.h.b16 %v180
    %v513 = vunpack.c.l.b16 %v181
    %v514 = vunpack.c.h.b16 %v181
    %v515 = vunpack.c.l.b16 %v182
    %v516 = vunpack.c.h.b16 %v182
    %v517 = vunpack.c.l.b16 %v183
    %v518 = vunpack.c.h.b16 %v183
    %v519 = vunpack.c.l.b16 %v184
    %v520 = vunpack.c.h.b16 %v184
    %v521 = vunpack.c.l.b16 %v185
    %v522 = vunpack.c.h.b16 %v185
    %v523 = vunpack.c.l.b16 %v186
    %v524 = vunpack.c.h.b16 %v186
    %v525 = vunpack.c.l.b16 %v187
    %v526 = vunpack.c.h.b16 %v187
    %v527 = vunpack.c.l.b16 %v188
    %v528 = vunpack.c.h.b16 %v188
    %v529 = vunpack.c.l.b16 %v189
    %v530 = vunpack.c.h.b16 %v189
    %v531 = vunpack.c.l.b16 %v190
    %v532 = vunpack.c.h.b16 %v190
    %v533 = vunpack.c.l.b16 %v191
    %v534 = vunpack.c.h.b16 %v191
    %v535 = vunpack.c.l.b16 %v192
    %v536 = vunpack.c.h.b16 %v192
    %v537 = vunpack.c.l.b16 %v193
    %v538 = vunpack.c.h.b16 %v193
    %v539 = vunpack.c.l.b16 %v194
    %v540 = vunpack.c.h.b16 %v194
    %v541 = vunpack.c.l.b16 %v195
    %v542 = vunpack.c.h.b16 %v195
    %v543 = vunpack.c.l.b16 %v196
    %v544 = vunpack.c.h.b16 %v196
    %v545 = vunpack.c.l.b16 %v197
    %v546 = vunpack.c.h.b16 %v197
    %v547 = vunpack.c.l.b16 %v198
    %v548 = vunpack.c.h.b16 %v198
    %v549 = vunpack.c.l.b16 %v199
    %v550 = vunpack.c.h.b16 %v199
    %v551 = vunpack.c.l.b16 %v200
    %v552 = vunpack.c.h.b16 %v200
    %v553 = vunpack.c.l.b16 %v201
    %v554 = vunpack.c.h.b16 %v201
    %v555 = vunpack.c.l.b16 %v202
    %v556 = vunpack.c.h.b16 %v202
    %v557 = vunpack.c.l.b16 %v203
    %v558 = vunpack.c.h.b16 %v203
    %v559 = vunpack.c.l.b16 %v204
    %v560 = vunpack.c.h.b16 %v204
    %v561 = vunpack.c.l.b16 %v205
    %v562 = vunpack.c.h.b16 %v205
    %v563 = vunpack.c.l.b16 %v206
    %v564 = vunpack.c.h.b16 %v206
    %v565 = vunpack.c.l.b16 %v207
    %v566 = vunpack.c.h.b16 %v207
    %v567 = vunpack.c.l.b16 %v208
    %v568 = vunpack.c.h.b16 %v208
    %v569 = vunpack.c.l.b16 %v209
    %v570 = vunpack.c.h.b16 %v209
    %v571 = vunpack.c.l.b16 %v210
    %v572 = vunpack.c.h.b16 %v210
    %v573 = vunpack.c.l.b16 %v211
    %v574 = vunpack.c.h.b16 %v211
    %v575 = vunpack.c.l.b16 %v212
    %v576 = vunpack.c.h.b16 %v212
    %v577 = vunpack.c.l.b16 %v213
    %v578 = vunpack.c.h.b16 %v213
    %v579 = vunpack.c.l.b16 %v214
    %v580 = vunpack.c.h.b16 %v214
    %v581 = vunpack.c.l.b16 %v215
    %v582 = vunpack.c.h.b16 %v215
    %v583 = vunpack.c.l.b16 %v216
    %v584 = vunpack.c.h.b16 %v216
    %v585 = vunpack.c.l.b16 %v217
    %v586 = vunpack.c.h.b16 %v217
    %v587 = vunpack.c.l.b16 %v218
    %v588 = vunpack.c.h.b16 %v218
    %v589 = vunpack.c.l.b16 %v219
    %v590 = vunpack.c.h.b16 %v219
    %v591 = vunpack.c.l.b16 %v220
    %v592 = vunpack.c.h.b16 %v220
    %v593 = vunpack.c.l.b16 %v221
    %v594 = vunpack.c.h.b16 %v221
    %v595 = vunpack.c.l.b16 %v222
    %v596 = vunpack.c.h.b16 %v222
    %v597 = vunpack.c.l.b16 %v223
    %v598 = vunpack.c.h.b16 %v223
    %v599 = vunpack.c.l.b16 %v224
    %v600 = vunpack.c.h.b16 %v224
    %v601 = vunpack.c.l.b16 %v225
    %v602 = vunpack.c.h.b16 %v225
    %v603 = vunpack.c.l.b16 %v226
    %v604 = vunpack.c.h.b16 %v226
    %v605 = vunpack.c.l.b16 %v227
    %v606 = vunpack.c.h.b16 %v227
    %v607 = vunpack.c.l.b16 %v228
    %v608 = vunpack.c.h.b16 %v228
    %v609 = vunpack.c.l.b16 %v229
    %v610 = vunpack.c.h.b16 %v229
    %v611 = vunpack.c.l.b16 %v230
    %v612 = vunpack.c.h.b16 %v230
    %v613 = vunpack.c.l.b16 %v231
    %v614 = vunpack.c.h.b16 %v231
    %v615 = vunpack.c.l.b16 %v232
    %v616 = vunpack.c.h.b16 %v232
    %v617 = vpack.c.b16 %v395, %v393
    %v618 = vpack.c.b16 %v396, %v394
    %v619 = vpack.c.b16 %v399, %v397
    %v620 = vpack.c.b16 %v400, %v398
    %v621 = vpack.c.b16 %v403, %v401
    %v622 = vpack.c.b16 %v404, %v402
    %v623 = vpack.c.b16 %v407, %v405
    %v624 = vpack.c.b16 %v408, %v406
    %v625 = vpack.c.b16 %v411, %v409
    %v626 = vpack.c.b16 %v412, %v410
    %v627 = vpack.c.b16 %v415, %v413
    %v628 = vpack.c.b16 %v416, %v414
    %v629 = vpack.c.b16 %v419, %v417
    %v630 = vpack.c.b16 %v420, %v418
    %v631 = vpack.c.b16 %v423, %v421
    %v632 = vpack.c.b16 %v424, %v422
    %v633 = vpack.c.b16 %v427, %v425
    %v634 = vpack.c.b16 %v428, %v426
    %v635 = vpack.c.b16 %v431, %v429
    %v636 = vpack.c.b16 %v432, %v430
    %v637 = vpack.c.b16 %v435, %v433
    %v638 = vpack.c.b16 %v436, %v434
    %v639 = vpack.c.b16 %v439, %v437
    %v640 = vpack.c.b16 %v440, %v438
    %v641 = vpack.c.b16 %v443, %v441
    %v642 = vpack.c.b16 %v444, %v442
    %v643 = vpack.c.b16 %v447, %v445
    %v644 = vpack.c.b16 %v448, %v446
    %v645 = vpack.c.b16 %v451, %v449
    %v646 = vpack.c.b16 %v452, %v450
    %v647 = vpack.c.b16 %v455, %v453
    %v648 = vpack.c.b16 %v456, %v454
    %v649 = vpack.c.b16 %v459, %v457
    %v650 = vpack.c.b16 %v460, %v458
    %v651 = vpack.c.b16 %v463, %v461
    %v652 = vpack.c.b16 %v464, %v462
    %v653 = vpack.c.b16 %v467, %v465
    %v654 = vpack.c.b16 %v468, %v466
    %v655 = vpack.c.b16 %v471, %v469
    %v656 = vpack.c.b16 %v472, %v470
    %v657 = vpack.c.b16 %v475, %v473
    %v658 = vpack.c.b16 %v476, %v474
    %v659 = vpack.c.b16 %v479, %v477
    %v660 = vpack.c.b16 %v480, %v478
    %v661 = vpack.c.b16 %v483, %v481
    %v662 = vpack.c.b16 %v484, %v482
    %v663 = vpack.c.b16 %v487, %v485
    %v664 = vpack.c.b16 %v488, %v486
    %v665 = vpack.c.b16 %v491, %v489
    %v666 = vpack.c.b16 %v492, %v490
    %v667 = vpack.c.b16 %v495, %v493
    %v668 = vpack.c.b16 %v496, %v494
    %v669 = vpack.c.b16 %v499, %v497
    %v670 = vpack.c.b16 %v500, %v498
    %v671 = vpack.c.b16 %v503, %v501
    %v672 = vpack.c.b16 %v504, %v502
    %v673 = vpack.c.b16 %v507, %v505
    %v674 = vpack.c.b16 %v508, %v506
    %v675 = vpack.c.b16 %v511, %v509
    %v676 = vpack.c.b16 %v512, %v510
    %v677 = vpack.c.b16 %v515, %v513
    %v678 = vpack.c.b16 %v516, %v514
    %v679 = vpack.c.b16 %v519, %v517
    %v680 = vpack.c.b16 %v520, %v518
    %v681 = vpack.c.b16 %v523, %v521
    %v682 = vpack.c.b16 %v524, %v522
    %v683 = vpack.c.b16 %v527, %v525
    %v684 = vpack.c.b16 %v528, %v526
    %v685 = vpack.c.b16 %v531, %v529
    %v686 = vpack.c.b16 %v532, %v530
    %v687 = vpack.c.b16 %v535, %v533
    %v688 = vpack.c.b16 %v536, %v534
    %v689 = vpack.c.b16 %v539, %v537
    %v690 = vpack.c.b16 %v540, %v538
    %v691 = vpack.c.b16 %v543, %v541
    %v692 = vpack.c.b16 %v544, %v542
    %v693 = vpack.c.b16 %v547, %v545
    %v694 = vpack.c.b16 %v548, %v546
    %v695 = vpack.c.b16 %v551, %v549
    %v696 = vpack.c.b16 %v552, %v550
    %v697 = vpack.c.b16 %v555, %v553
    %v698 = vpack.c.b16 %v556, %v554
    %v699 = vpack.c.b16 %v559, %v557
    %v700 = vpack.c.b16 %v560, %v558
    %v701 = vpack.c.b16 %v563, %v561
    %v702 = vpack.c.b16 %v564, %v562
    %v703 = vpack.c.b16 %v567, %v565
    %v704 = vpack.c.b16 %v568, %v566
    %v705 = vpack.c.b16 %v571, %v569
    %v706 = vpack.c.b16 %v572, %v570
    %v707 = vpack.c.b16 %v575, %v573
    %v708 = vpack.c.b16 %v576, %v574
    %v709 = vpack.c.b16 %v579, %v577
    %v710 = vpack.c.b16 %v580, %v578
    %v711 = vpack.c.b16 %v583, %v581
    %v712 = vpack.c.b16 %v584, %v582
    %v713 = vpack.c.b16 %v587, %v585
    %v714 = vpack.c.b16 %v588, %v586
    %v715 = vpack.c.b16 %v591, %v589
    %v716 = vpack.c.b16 %v592, %v590
    %v717 = vpack.c.b16 %v595, %v593
    %v718 = vpack.c.b16 %v596, %v594
    %v719 = vpack.c.b16 %v599, %v597
    %v720 = vpack.c.b16 %v600, %v598
    %v721 = vpack.c.b16 %v603, %v601
    %v722 = vpack.c.b16 %v604, %v602
    %v723 = vpack.c.b16 %v607, %v605
    %v724 = vpack.c.b16 %v608, %v606
    %v725 = vpack.c.b16 %v611, %v609
    %v726 = vpack.c.b16 %v612, %v610
    %v727 = vpack.c.b16 %v615, %v613
    %v728 = vpack.c.b16 %v616, %v614
    %841 = vmatprep.subr.bf16.mxu0 %v632
    %842 = vmatpush1.bf16.msra.mxu0 %v631
    %843 = vmatprep.subr.bf16.mxu0 %v630
    %844 = vmatpush1.bf16.msra.mxu0 %v629
    %845 = vmatprep.subr.bf16.mxu0 %v628
    %846 = vmatpush1.bf16.msra.mxu0 %v627
    %847 = vmatprep.subr.bf16.mxu0 %v626
    %848 = vmatpush1.bf16.msra.mxu0 %v625
    %849 = vmatprep.subr.bf16.mxu0 %v624
    %850 = vmatpush1.bf16.msra.mxu0 %v623
    %851 = vmatprep.subr.bf16.mxu0 %v622
    %852 = vmatpush1.bf16.msra.mxu0 %v621
    %853 = vmatprep.subr.bf16.mxu0 %v620
    %854 = vmatpush1.bf16.msra.mxu0 %v619
    %855 = vmatprep.subr.bf16.mxu0 %v618
    %856 = vmatpush1.bf16.msra.mxu0 %v617
    %857 = vmatprep.subr.bf16.mxu0 %v648
    %858 = vmatpush2.bf16.msra.mxu0 %v647
    %859 = vmatprep.subr.bf16.mxu0 %v646
    %860 = vmatpush2.bf16.msra.mxu0 %v645
    %861 = vmatprep.subr.bf16.mxu0 %v644
    %862 = vmatpush2.bf16.msra.mxu0 %v643
    %863 = vmatprep.subr.bf16.mxu0 %v642
    %864 = vmatpush2.bf16.msra.mxu0 %v641
    %865 = vmatprep.subr.bf16.mxu0 %v640
    %866 = vmatpush2.bf16.msra.mxu0 %v639
    %867 = vmatprep.subr.bf16.mxu0 %v638
    %868 = vmatpush2.bf16.msra.mxu0 %v637
    %869 = vmatprep.subr.bf16.mxu0 %v636
    %870 = vmatpush2.bf16.msra.mxu0 %v635
    %871 = vmatprep.subr.bf16.mxu0 %v634
    %872 = vmatpush2.bf16.msra.mxu0 %v633
    %873 = vmatprep.mubr.bf16.mxu0 %v268
    %874 = vmatmul.mubr.bf16.gmra.mxu0 %v267
    %v875 = vpop.f32.mrf.mxu0
    %v876 = vadd.f32 %v238, %v875
    %v877 = vpop.f32.mrf.mxu0
    %v878 = vadd.f32 %v242, %v877
    %v879 = vpop.f32.mrf.mxu0
    %v880 = vadd.f32 %v238, %v879
    %v881 = vpop.f32.mrf.mxu0
    %v882 = vadd.f32 %v242, %v881
    %883 = vdwg.mxu0
    %884 = vmatprep.subr.bf16.mxu0 %v664
    %885 = vmatpush1.bf16.msra.mxu0 %v663
    %886 = vmatprep.subr.bf16.mxu0 %v662
    %887 = vmatpush1.bf16.msra.mxu0 %v661
    %888 = vmatprep.subr.bf16.mxu0 %v660
    %889 = vmatpush1.bf16.msra.mxu0 %v659
    %890 = vmatprep.subr.bf16.mxu0 %v658
    %891 = vmatpush1.bf16.msra.mxu0 %v657
    %892 = vmatprep.subr.bf16.mxu0 %v656
    %893 = vmatpush1.bf16.msra.mxu0 %v655
    %894 = vmatprep.subr.bf16.mxu0 %v654
    %895 = vmatpush1.bf16.msra.mxu0 %v653
    %896 = vmatprep.subr.bf16.mxu0 %v652
    %897 = vmatpush1.bf16.msra.mxu0 %v651
    %898 = vmatprep.subr.bf16.mxu0 %v650
    %899 = vmatpush1.bf16.msra.mxu0 %v649
    %900 = vmatprep.subr.bf16.mxu0 %v680
    %901 = vmatpush2.bf16.msra.mxu0 %v679
    %902 = vmatprep.subr.bf16.mxu0 %v678
    %903 = vmatpush2.bf16.msra.mxu0 %v677
    %904 = vmatprep.subr.bf16.mxu0 %v676
    %905 = vmatpush2.bf16.msra.mxu0 %v675
    %906 = vmatprep.subr.bf16.mxu0 %v674
    %907 = vmatpush2.bf16.msra.mxu0 %v673
    %908 = vmatprep.subr.bf16.mxu0 %v672
    %909 = vmatpush2.bf16.msra.mxu0 %v671
    %910 = vmatprep.subr.bf16.mxu0 %v670
    %911 = vmatpush2.bf16.msra.mxu0 %v669
    %912 = vmatprep.subr.bf16.mxu0 %v668
    %913 = vmatpush2.bf16.msra.mxu0 %v667
    %914 = vmatprep.subr.bf16.mxu0 %v666
    %915 = vmatpush2.bf16.msra.mxu0 %v665
    %916 = vmatprep.mubr.bf16.mxu0 %v270
    %917 = vmatmul.mubr.bf16.gmra.mxu0 %v269
    %v918 = vpop.f32.mrf.mxu0
    %v919 = vadd.f32 %v876, %v918
    %v920 = vpop.f32.mrf.mxu0
    %v921 = vadd.f32 %v878, %v920
    %v922 = vpop.f32.mrf.mxu0
    %v923 = vadd.f32 %v880, %v922
    %v924 = vpop.f32.mrf.mxu0
    %v925 = vadd.f32 %v882, %v924
    %926 = vdwg.mxu0
    %927 = vmatprep.subr.bf16.mxu0 %v696
    %928 = vmatpush1.bf16.msra.mxu0 %v695
    %929 = vmatprep.subr.bf16.mxu0 %v694
    %930 = vmatpush1.bf16.msra.mxu0 %v693
    %931 = vmatprep.subr.bf16.mxu0 %v692
    %932 = vmatpush1.bf16.msra.mxu0 %v691
    %933 = vmatprep.subr.bf16.mxu0 %v690
    %934 = vmatpush1.bf16.msra.mxu0 %v689
    %935 = vmatprep.subr.bf16.mxu0 %v688
    %936 = vmatpush1.bf16.msra.mxu0 %v687
    %937 = vmatprep.subr.bf16.mxu0 %v686
    %938 = vmatpush1.bf16.msra.mxu0 %v685
    %939 = vmatprep.subr.bf16.mxu0 %v684
    %940 = vmatpush1.bf16.msra.mxu0 %v683
    %941 = vmatprep.subr.bf16.mxu0 %v682
    %942 = vmatpush1.bf16.msra.mxu0 %v681
    %943 = vmatprep.subr.bf16.mxu0 %v712
    %944 = vmatpush2.bf16.msra.mxu0 %v711
    %945 = vmatprep.subr.bf16.mxu0 %v710
    %946 = vmatpush2.bf16.msra.mxu0 %v709
    %947 = vmatprep.subr.bf16.mxu0 %v708
    %948 = vmatpush2.bf16.msra.mxu0 %v707
    %949 = vmatprep.subr.bf16.mxu0 %v706
    %950 = vmatpush2.bf16.msra.mxu0 %v705
    %951 = vmatprep.subr.bf16.mxu0 %v704
    %952 = vmatpush2.bf16.msra.mxu0 %v703
    %953 = vmatprep.subr.bf16.mxu0 %v702
    %954 = vmatpush2.bf16.msra.mxu0 %v701
    %955 = vmatprep.subr.bf16.mxu0 %v700
    %956 = vmatpush2.bf16.msra.mxu0 %v699
    %957 = vmatprep.subr.bf16.mxu0 %v698
    %958 = vmatpush2.bf16.msra.mxu0 %v697
    %959 = vmatprep.mubr.bf16.mxu0 %v272
    %960 = vmatmul.mubr.bf16.gmra.mxu0 %v271
    %v961 = vpop.f32.mrf.mxu0
    %v962 = vadd.f32 %v919, %v961
    %v963 = vpop.f32.mrf.mxu0
    %v964 = vadd.f32 %v921, %v963
    %v965 = vpop.f32.mrf.mxu0
    %v966 = vadd.f32 %v923, %v965
    %v967 = vpop.f32.mrf.mxu0
    %v968 = vadd.f32 %v925, %v967
    %969 = vdwg.mxu0
    %970 = vmatprep.subr.bf16.mxu0 %v728
    %971 = vmatpush1.bf16.msra.mxu0 %v727
    %972 = vmatprep.subr.bf16.mxu0 %v726
    %973 = vmatpush1.bf16.msra.mxu0 %v725
    %974 = vmatprep.subr.bf16.mxu0 %v724
    %975 = vmatpush1.bf16.msra.mxu0 %v723
    %976 = vmatprep.subr.bf16.mxu0 %v722
    %977 = vmatpush1.bf16.msra.mxu0 %v721
    %978 = vmatprep.subr.bf16.mxu0 %v720
    %979 = vmatpush1.bf16.msra.mxu0 %v719
    %980 = vmatprep.subr.bf16.mxu0 %v718
    %981 = vmatpush1.bf16.msra.mxu0 %v717
    %982 = vmatprep.subr.bf16.mxu0 %v716
    %983 = vmatpush1.bf16.msra.mxu0 %v715
    %984 = vmatprep.subr.bf16.mxu0 %v714
    %985 = vmatpush1.bf16.msra.mxu0 %v713
    %986 = vmatprep.subr.bf16.mxu0 0
    %987 = vmatpush2.bf16.msra.mxu0 0
    %988 = vmatprep.subr.bf16.mxu0 0
    %989 = vmatpush2.bf16.msra.mxu0 0
    %990 = vmatprep.subr.bf16.mxu0 0
    %991 = vmatpush2.bf16.msra.mxu0 0
    %992 = vmatprep.subr.bf16.mxu0 0
    %993 = vmatpush2.bf16.msra.mxu0 0
    %994 = vmatprep.subr.bf16.mxu0 0
    %995 = vmatpush2.bf16.msra.mxu0 0
    %996 = vmatprep.subr.bf16.mxu0 0
    %997 = vmatpush2.bf16.msra.mxu0 0
    %998 = vmatprep.subr.bf16.mxu0 0
    %999 = vmatpush2.bf16.msra.mxu0 0
    %1000 = vmatprep.subr.bf16.mxu0 0
    %1001 = vmatpush2.bf16.msra.mxu0 0
    %1002 = vmatprep.mubr.bf16.mxu0 0
    %1003 = vmatmul.mubr.bf16.gmra.mxu0 %v273
    %v1004 = vpop.f32.mrf.mxu0
    %v1005 = vadd.f32 %v962, %v1004
    %v1006 = vpop.f32.mrf.mxu0
    %v1007 = vadd.f32 %v964, %v1006
    %v1008 = vpop.f32.mrf.mxu0
    %v1009 = vadd.f32 %v966, %v1008
    %v1010 = vpop.f32.mrf.mxu0
    %v1011 = vadd.f32 %v968, %v1010
    %1012 = vdwg.mxu0
    %v1013 = vmax.f32 %v1005, 0.0
    %v1014 = vmax.f32 %v1007, 0.0
    %v1015 = vmax.f32 %v1009, 0.0
    %v1016 = vmax.f32 %v1011, 0.0
    %v1017 = vpack.c.bf16 %v1015, %v1013
    %v1018 = vpack.c.bf16 %v1016, %v1014
    %v1019 = vld [vmem:[%s3] sm:$0xf]
    %v1020 = vld [vmem:[%s3 + $0x4] sm:$0xf]
    %v1021 = vld [vmem:[%s3 + $0x8] sm:$0xf]
    %v1022 = vld [vmem:[%s3 + $0xc] sm:$0xf]
    %v1023 = vld [vmem:[%s3 + $0x10] sm:$0xf]
    %v1024 = vld [vmem:[%s3 + $0x14] sm:$0xf]
    %v1025 = vld [vmem:[%s3 + $0x18] sm:$0xf]
    %v1026 = vld [vmem:[%s3 + $0x1c] sm:$0xf]
    %v1027 = vld [vmem:[%s3 + $0x20] sm:$0xf]
    %v1028 = vld [vmem:[%s3 + $0x24] sm:$0xf]
    %v1029 = vld [vmem:[%s3 + $0x28] sm:$0xf]
    %v1030 = vld [vmem:[%s3 + $0x2c] sm:$0xf]
    %v1031 = vld [vmem:[%s3 + $0x30] sm:$0xf]
    %v1032 = vld [vmem:[%s3 + $0x34] sm:$0xf]
    %v1033 = vld [vmem:[%s3 + $0x38] sm:$0xf]
    %v1034 = vld [vmem:[%s3 + $0x3c] sm:$0xf]
    %v1035 = vld [vmem:[%s3 + $0x40] sm:$0xf]
    %v1036 = vld [vmem:[%s3 + $0x44] sm:$0xf]
    %v1037 = vld [vmem:[%s3 + $0x48] sm:$0xf]
    %v1038 = vld [vmem:[%s3 + $0x4c] sm:$0xf]
    %v1039 = vld [vmem:[%s3 + $0x50] sm:$0xf]
    %v1040 = vld [vmem:[%s3 + $0x54] sm:$0xf]
    %v1041 = vld [vmem:[%s3 + $0x58] sm:$0xf]
    %v1042 = vld [vmem:[%s3 + $0x5c] sm:$0xf]
    %v1043 = vld [vmem:[%s3 + $0x60] sm:$0xf]
    %v1044 = vld [vmem:[%s3 + $0x64] sm:$0xf]
    %v1045 = vld [vmem:[%s3 + $0x68] sm:$0xf]
    %v1046 = vld [vmem:[%s3 + $0x6c] sm:$0xf]
    %v1047 = vld [vmem:[%s3 + $0x70] sm:$0xf]
    %v1048 = vld [vmem:[%s3 + $0x74] sm:$0xf]
    %v1049 = vld [vmem:[%s3 + $0x78] sm:$0xf]
    %v1050 = vld [vmem:[%s3 + $0x7c] sm:$0xf]
    %v1051 = vld [vmem:[%s4] sm:$0x1]
    %v1053 = vlaneseq
    %v1054 = vshrl.u32 %v1053, 7
    %v1055 = vsub.s32 0, %v1054
    %v1056 = vrot.slane %v1051, %v1055
    %v1090 = vunpack.c.l.b16 %v1019
    %v1091 = vunpack.c.l.b16 %v1020
    %v1092 = vunpack.c.l.b16 %v1021
    %v1093 = vunpack.c.l.b16 %v1022
    %v1094 = vunpack.c.l.b16 %v1023
    %v1095 = vunpack.c.l.b16 %v1024
    %v1096 = vunpack.c.l.b16 %v1025
    %v1097 = vunpack.c.l.b16 %v1026
    %v1098 = vunpack.c.l.b16 %v1027
    %v1099 = vunpack.c.l.b16 %v1028
    %v1100 = vunpack.c.l.b16 %v1029
    %v1101 = vunpack.c.l.b16 %v1030
    %v1102 = vunpack.c.l.b16 %v1031
    %v1103 = vunpack.c.l.b16 %v1032
    %v1104 = vunpack.c.l.b16 %v1033
    %v1105 = vunpack.c.l.b16 %v1034
    %v1106 = vunpack.c.l.b16 %v1035
    %v1107 = vunpack.c.l.b16 %v1036
    %v1108 = vunpack.c.l.b16 %v1037
    %v1109 = vunpack.c.l.b16 %v1038
    %v1110 = vunpack.c.l.b16 %v1039
    %v1111 = vunpack.c.l.b16 %v1040
    %v1112 = vunpack.c.l.b16 %v1041
    %v1113 = vunpack.c.l.b16 %v1042
    %v1114 = vunpack.c.l.b16 %v1043
    %v1115 = vunpack.c.l.b16 %v1044
    %v1116 = vunpack.c.l.b16 %v1045
    %v1117 = vunpack.c.l.b16 %v1046
    %v1118 = vunpack.c.l.b16 %v1047
    %v1119 = vunpack.c.l.b16 %v1048
    %v1120 = vunpack.c.l.b16 %v1049
    %v1121 = vunpack.c.l.b16 %v1050
    %v1122 = vpack.c.b16 %v1091, %v1090
    %v1123 = vpack.c.b16 %v1093, %v1092
    %v1124 = vpack.c.b16 %v1095, %v1094
    %v1125 = vpack.c.b16 %v1097, %v1096
    %v1126 = vpack.c.b16 %v1099, %v1098
    %v1127 = vpack.c.b16 %v1101, %v1100
    %v1128 = vpack.c.b16 %v1103, %v1102
    %v1129 = vpack.c.b16 %v1105, %v1104
    %v1130 = vpack.c.b16 %v1107, %v1106
    %v1131 = vpack.c.b16 %v1109, %v1108
    %v1132 = vpack.c.b16 %v1111, %v1110
    %v1133 = vpack.c.b16 %v1113, %v1112
    %v1134 = vpack.c.b16 %v1115, %v1114
    %v1135 = vpack.c.b16 %v1117, %v1116
    %v1136 = vpack.c.b16 %v1119, %v1118
    %v1137 = vpack.c.b16 %v1121, %v1120
    %1154 = vmatprep.subr.bf16.mxu0 0
    %1155 = vmatpush1.bf16.msra.mxu0 %v1129
    %1156 = vmatprep.subr.bf16.mxu0 0
    %1157 = vmatpush1.bf16.msra.mxu0 %v1128
    %1158 = vmatprep.subr.bf16.mxu0 0
    %1159 = vmatpush1.bf16.msra.mxu0 %v1127
    %1160 = vmatprep.subr.bf16.mxu0 0
    %1161 = vmatpush1.bf16.msra.mxu0 %v1126
    %1162 = vmatprep.subr.bf16.mxu0 0
    %1163 = vmatpush1.bf16.msra.mxu0 %v1125
    %1164 = vmatprep.subr.bf16.mxu0 0
    %1165 = vmatpush1.bf16.msra.mxu0 %v1124
    %1166 = vmatprep.subr.bf16.mxu0 0
    %1167 = vmatpush1.bf16.msra.mxu0 %v1123
    %1168 = vmatprep.subr.bf16.mxu0 0
    %1169 = vmatpush1.bf16.msra.mxu0 %v1122
    %1170 = vmatprep.subr.bf16.mxu0 0
    %1171 = vmatpush2.bf16.msra.mxu0 %v1137
    %1172 = vmatprep.subr.bf16.mxu0 0
    %1173 = vmatpush2.bf16.msra.mxu0 %v1136
    %1174 = vmatprep.subr.bf16.mxu0 0
    %1175 = vmatpush2.bf16.msra.mxu0 %v1135
    %1176 = vmatprep.subr.bf16.mxu0 0
    %1177 = vmatpush2.bf16.msra.mxu0 %v1134
    %1178 = vmatprep.subr.bf16.mxu0 0
    %1179 = vmatpush2.bf16.msra.mxu0 %v1133
    %1180 = vmatprep.subr.bf16.mxu0 0
    %1181 = vmatpush2.bf16.msra.mxu0 %v1132
    %1182 = vmatprep.subr.bf16.mxu0 0
    %1183 = vmatpush2.bf16.msra.mxu0 %v1131
    %1184 = vmatprep.subr.bf16.mxu0 0
    %1185 = vmatpush2.bf16.msra.mxu0 %v1130
    %1186 = vmatprep.mubr.bf16.mxu0 %v1018
    %1187 = vmatmul.mubr.bf16.gmra.mxu0 %v1017
    %v1188 = vpop.f32.mrf.mxu0
    %v1189 = vadd.f32 %v1056, %v1188
    %v1190 = vpop.f32.mrf.mxu0
    %v1191 = vpop.f32.mrf.mxu0
    %v1192 = vadd.f32 %v1056, %v1191
    %v1193 = vpop.f32.mrf.mxu0
    %1194 = vdwg.mxu0
    %v1195 = vmax.f32 %v1189, 0.0
    %v1196 = vmax.f32 %v1192, 0.0
    %v1197 = vpack.c.bf16 %v1196, %v1195
    %v1198 = vld [vmem:[#allocation4] sm:$0xf]
    %v1199 = vld [vmem:[#allocation4 + $0x4] sm:$0xf]
    %v1200 = vld [vmem:[#allocation4 + $0x8] sm:$0xf]
    %v1201 = vld [vmem:[#allocation4 + $0xc] sm:$0xf]
    %v1202 = vld [vmem:[#allocation4 + $0x10] sm:$0xf]
    %v1203 = vld [vmem:[#allocation4 + $0x14] sm:$0xf]
    %v1204 = vld [vmem:[#allocation4 + $0x18] sm:$0xf]
    %v1205 = vld [vmem:[#allocation4 + $0x1c] sm:$0xf]
    %v1206 = vld [vmem:[#allocation4 + $0x20] sm:$0xf]
    %v1207 = vld [vmem:[#allocation4 + $0x24] sm:$0xf]
    %v1208 = vld [vmem:[#allocation4 + $0x28] sm:$0xf]
    %v1209 = vld [vmem:[#allocation4 + $0x2c] sm:$0xf]
    %v1210 = vld [vmem:[#allocation4 + $0x30] sm:$0xf]
    %v1211 = vld [vmem:[#allocation4 + $0x34] sm:$0xf]
    %v1212 = vld [vmem:[#allocation4 + $0x38] sm:$0xf]
    %v1213 = vld [vmem:[#allocation4 + $0x3c] sm:$0xf]
    %v1214 = vld [vmem:[%s6] sm:$0x1]
    %v1216 = vlaneseq
    %v1217 = vshrl.u32 %v1216, 7
    %v1218 = vsub.s32 0, %v1217
    %v1219 = vrot.slane %v1214, %v1218
    %v1237 = vunpack.c.l.b16 %v1198
    %v1238 = vunpack.c.l.b16 %v1199
    %v1239 = vunpack.c.l.b16 %v1200
    %v1240 = vunpack.c.l.b16 %v1201
    %v1241 = vunpack.c.l.b16 %v1202
    %v1242 = vunpack.c.l.b16 %v1203
    %v1243 = vunpack.c.l.b16 %v1204
    %v1244 = vunpack.c.l.b16 %v1205
    %v1245 = vunpack.c.l.b16 %v1206
    %v1246 = vunpack.c.l.b16 %v1207
    %v1247 = vunpack.c.l.b16 %v1208
    %v1248 = vunpack.c.l.b16 %v1209
    %v1249 = vunpack.c.l.b16 %v1210
    %v1250 = vunpack.c.l.b16 %v1211
    %v1251 = vunpack.c.l.b16 %v1212
    %v1252 = vunpack.c.l.b16 %v1213
    %v1253 = vpack.c.b16 %v1238, %v1237
    %v1254 = vpack.c.b16 %v1240, %v1239
    %v1255 = vpack.c.b16 %v1242, %v1241
    %v1256 = vpack.c.b16 %v1244, %v1243
    %v1257 = vpack.c.b16 %v1246, %v1245
    %v1258 = vpack.c.b16 %v1248, %v1247
    %v1259 = vpack.c.b16 %v1250, %v1249
    %v1260 = vpack.c.b16 %v1252, %v1251
    %1269 = vmatprep.subr.bf16.mxu0 0
    %1270 = vmatpush1.bf16.msra.mxu0 %v1260
    %1271 = vmatprep.subr.bf16.mxu0 0
    %1272 = vmatpush1.bf16.msra.mxu0 %v1259
    %1273 = vmatprep.subr.bf16.mxu0 0
    %1274 = vmatpush1.bf16.msra.mxu0 %v1258
    %1275 = vmatprep.subr.bf16.mxu0 0
    %1276 = vmatpush1.bf16.msra.mxu0 %v1257
    %1277 = vmatprep.subr.bf16.mxu0 0
    %1278 = vmatpush1.bf16.msra.mxu0 %v1256
    %1279 = vmatprep.subr.bf16.mxu0 0
    %1280 = vmatpush1.bf16.msra.mxu0 %v1255
    %1281 = vmatprep.subr.bf16.mxu0 0
    %1282 = vmatpush1.bf16.msra.mxu0 %v1254
    %1283 = vmatprep.subr.bf16.mxu0 0
    %1284 = vmatpush1.bf16.msra.mxu0 %v1253
    %1285 = vmatprep.subr.bf16.mxu0 0
    %1286 = vmatpush2.bf16.msra.mxu0 0
    %1287 = vmatprep.subr.bf16.mxu0 0
    %1288 = vmatpush2.bf16.msra.mxu0 0
    %1289 = vmatprep.subr.bf16.mxu0 0
    %1290 = vmatpush2.bf16.msra.mxu0 0
    %1291 = vmatprep.subr.bf16.mxu0 0
    %1292 = vmatpush2.bf16.msra.mxu0 0
    %1293 = vmatprep.subr.bf16.mxu0 0
    %1294 = vmatpush2.bf16.msra.mxu0 0
    %1295 = vmatprep.subr.bf16.mxu0 0
    %1296 = vmatpush2.bf16.msra.mxu0 0
    %1297 = vmatprep.subr.bf16.mxu0 0
    %1298 = vmatpush2.bf16.msra.mxu0 0
    %1299 = vmatprep.subr.bf16.mxu0 0
    %1300 = vmatpush2.bf16.msra.mxu0 0
    %1301 = vmatprep.mubr.bf16.mxu0 0
    %1302 = vmatmul.mubr.bf16.gmra.mxu0 %v1197
    %v1303 = vpop.f32.mrf.mxu0
    %v1304 = vadd.f32 %v1219, %v1303
    %v1305 = vpop.f32.mrf.mxu0
    %v1306 = vpop.f32.mrf.mxu0
    %v1307 = vadd.f32 %v1219, %v1306
    %v1308 = vpop.f32.mrf.mxu0
    %1309 = vdwg.mxu0
    %v1310 = vmax.f32 %v1304, 0.0
    %v1311 = vmax.f32 %v1307, 0.0
    %v1312 = vpack.c.bf16 %v1311, %v1310
    %v1313 = vld [vmem:[#allocation6] sm:$0xf]
    %v1314 = vld [vmem:[#allocation6 + $0x4] sm:$0xf]
    %v1315 = vld [vmem:[#allocation6 + $0x8] sm:$0xf]
    %v1316 = vld [vmem:[#allocation6 + $0xc] sm:$0xf]
    %v1317 = vld [vmem:[#allocation6 + $0x10] sm:$0xf]
    %v1318 = vld [vmem:[#allocation6 + $0x14] sm:$0xf]
    %v1319 = vld [vmem:[#allocation6 + $0x18] sm:$0xf]
    %v1320 = vld [vmem:[#allocation6 + $0x1c] sm:$0xf]
    %v1321 = vld [vmem:[#allocation6 + $0x20] sm:$0xf]
    %v1322 = vld [vmem:[#allocation6 + $0x24] sm:$0xf]
    %v1323 = vld [vmem:[#allocation6 + $0x28] sm:$0xf]
    %v1324 = vld [vmem:[#allocation6 + $0x2c] sm:$0xf]
    %v1325 = vld [vmem:[#allocation6 + $0x30] sm:$0xf]
    %v1326 = vld [vmem:[#allocation6 + $0x34] sm:$0xf]
    %v1327 = vld [vmem:[#allocation6 + $0x38] sm:$0xf]
    %v1328 = vld [vmem:[#allocation6 + $0x3c] sm:$0xf]
    %v1329 = vld [vmem:[%s8] sm:$0x1]
    %v1331 = vlaneseq
    %v1332 = vshrl.u32 %v1331, 7
    %v1333 = vsub.s32 0, %v1332
    %v1334 = vrot.slane %v1329, %v1333
    %v1352 = vunpack.c.l.b16 %v1313
    %v1353 = vunpack.c.l.b16 %v1314
    %v1354 = vunpack.c.l.b16 %v1315
    %v1355 = vunpack.c.l.b16 %v1316
    %v1356 = vunpack.c.l.b16 %v1317
    %v1357 = vunpack.c.l.b16 %v1318
    %v1358 = vunpack.c.l.b16 %v1319
    %v1359 = vunpack.c.l.b16 %v1320
    %v1360 = vunpack.c.l.b16 %v1321
    %v1361 = vunpack.c.l.b16 %v1322
    %v1362 = vunpack.c.l.b16 %v1323
    %v1363 = vunpack.c.l.b16 %v1324
    %v1364 = vunpack.c.l.b16 %v1325
    %v1365 = vunpack.c.l.b16 %v1326
    %v1366 = vunpack.c.l.b16 %v1327
    %v1367 = vunpack.c.l.b16 %v1328
    %v1368 = vpack.c.b16 %v1353, %v1352
    %v1369 = vpack.c.b16 %v1355, %v1354
    %v1370 = vpack.c.b16 %v1357, %v1356
    %v1371 = vpack.c.b16 %v1359, %v1358
    %v1372 = vpack.c.b16 %v1361, %v1360
    %v1373 = vpack.c.b16 %v1363, %v1362
    %v1374 = vpack.c.b16 %v1365, %v1364
    %v1375 = vpack.c.b16 %v1367, %v1366
    %1384 = vmatprep.subr.bf16.mxu0 0
    %1385 = vmatpush1.bf16.msra.mxu0 %v1375
    %1386 = vmatprep.subr.bf16.mxu0 0
    %1387 = vmatpush1.bf16.msra.mxu0 %v1374
    %1388 = vmatprep.subr.bf16.mxu0 0
    %1389 = vmatpush1.bf16.msra.mxu0 %v1373
    %1390 = vmatprep.subr.bf16.mxu0 0
    %1391 = vmatpush1.bf16.msra.mxu0 %v1372
    %1392 = vmatprep.subr.bf16.mxu0 0
    %1393 = vmatpush1.bf16.msra.mxu0 %v1371
    %1394 = vmatprep.subr.bf16.mxu0 0
    %1395 = vmatpush1.bf16.msra.mxu0 %v1370
    %1396 = vmatprep.subr.bf16.mxu0 0
    %1397 = vmatpush1.bf16.msra.mxu0 %v1369
    %1398 = vmatprep.subr.bf16.mxu0 0
    %1399 = vmatpush1.bf16.msra.mxu0 %v1368
    %1400 = vmatprep.subr.bf16.mxu0 0
    %1401 = vmatpush2.bf16.msra.mxu0 0
    %1402 = vmatprep.subr.bf16.mxu0 0
    %1403 = vmatpush2.bf16.msra.mxu0 0
    %1404 = vmatprep.subr.bf16.mxu0 0
    %1405 = vmatpush2.bf16.msra.mxu0 0
    %1406 = vmatprep.subr.bf16.mxu0 0
    %1407 = vmatpush2.bf16.msra.mxu0 0
    %1408 = vmatprep.subr.bf16.mxu0 0
    %1409 = vmatpush2.bf16.msra.mxu0 0
    %1410 = vmatprep.subr.bf16.mxu0 0
    %1411 = vmatpush2.bf16.msra.mxu0 0
    %1412 = vmatprep.subr.bf16.mxu0 0
    %1413 = vmatpush2.bf16.msra.mxu0 0
    %1414 = vmatprep.subr.bf16.mxu0 0
    %1415 = vmatpush2.bf16.msra.mxu0 0
    %1416 = vmatprep.mubr.bf16.mxu0 0
    %1417 = vmatmul.mubr.bf16.gmra.mxu0 %v1312
    %v1418 = vpop.f32.mrf.mxu0
    %v1419 = vadd.f32 %v1334, %v1418
    %v1420 = vpop.f32.mrf.mxu0
    %v1421 = vpop.f32.mrf.mxu0
    %v1422 = vadd.f32 %v1334, %v1421
    %v1423 = vpop.f32.mrf.mxu0
    %1424 = vdwg.mxu0
    %v1425 = vmax.f32 %v1419, 0.0
    %v1426 = vmax.f32 %v1422, 0.0
    %v1427 = vpack.c.bf16 %v1426, %v1425
    %v1428 = vld [vmem:[#allocation7] sm:$0xff]
    %v1429 = vld [vmem:[#allocation7 + $0x8] sm:$0xff]
    %v1430 = vld [vmem:[#allocation7 + $0x10] sm:$0xff]
    %v1431 = vld [vmem:[#allocation7 + $0x18] sm:$0xff]
    %v1432 = vld [vmem:[#allocation7 + $0x20] sm:$0xff]
    %v1433 = vld [vmem:[#allocation7 + $0x28] sm:$0xff]
    %v1434 = vld [vmem:[#allocation7 + $0x30] sm:$0xff]
    %v1435 = vld [vmem:[#allocation7 + $0x38] sm:$0xff]
    %v1436 = vld [vmem:[#allocation7 + $0x40] sm:$0xff]
    %v1437 = vld [vmem:[#allocation7 + $0x48] sm:$0xff]
    %v1438 = vld [vmem:[#allocation7 + $0x50] sm:$0xff]
    %v1439 = vld [vmem:[#allocation7 + $0x58] sm:$0xff]
    %v1440 = vld [vmem:[#allocation7 + $0x60] sm:$0xff]
    %v1441 = vld [vmem:[#allocation7 + $0x68] sm:$0xff]
    %v1442 = vld [vmem:[#allocation7 + $0x70] sm:$0xff]
    %v1443 = vld [vmem:[#allocation7 + $0x78] sm:$0xff]
    %v1444 = vld [vmem:[%s10] sm:$0x3]
    %v1446 = vlaneseq
    %v1447 = vshrl.u32 %v1446, 7
    %v1448 = vsub.s32 0, %v1447
    %v1449 = vrot.slane %v1444, %v1448
    %v1450 = vlaneseq
    %v1451 = vshrl.u32 %v1450, 7
    %v1452 = vsub.s32 1, %v1451
    %v1453 = vrot.slane %v1444, %v1452
    %v1472 = vunpack.c.l.b16 %v1428
    %v1473 = vunpack.c.h.b16 %v1428
    %v1474 = vunpack.c.l.b16 %v1429
    %v1475 = vunpack.c.h.b16 %v1429
    %v1476 = vunpack.c.l.b16 %v1430
    %v1477 = vunpack.c.h.b16 %v1430
    %v1478 = vunpack.c.l.b16 %v1431
    %v1479 = vunpack.c.h.b16 %v1431
    %v1480 = vunpack.c.l.b16 %v1432
    %v1481 = vunpack.c.h.b16 %v1432
    %v1482 = vunpack.c.l.b16 %v1433
    %v1483 = vunpack.c.h.b16 %v1433
    %v1484 = vunpack.c.l.b16 %v1434
    %v1485 = vunpack.c.h.b16 %v1434
    %v1486 = vunpack.c.l.b16 %v1435
    %v1487 = vunpack.c.h.b16 %v1435
    %v1488 = vunpack.c.l.b16 %v1436
    %v1489 = vunpack.c.h.b16 %v1436
    %v1490 = vunpack.c.l.b16 %v1437
    %v1491 = vunpack.c.h.b16 %v1437
    %v1492 = vunpack.c.l.b16 %v1438
    %v1493 = vunpack.c.h.b16 %v1438
    %v1494 = vunpack.c.l.b16 %v1439
    %v1495 = vunpack.c.h.b16 %v1439
    %v1496 = vunpack.c.l.b16 %v1440
    %v1497 = vunpack.c.h.b16 %v1440
    %v1498 = vunpack.c.l.b16 %v1441
    %v1499 = vunpack.c.h.b16 %v1441
    %v1500 = vunpack.c.l.b16 %v1442
    %v1501 = vunpack.c.h.b16 %v1442
    %v1502 = vunpack.c.l.b16 %v1443
    %v1503 = vunpack.c.h.b16 %v1443
    %v1504 = vpack.c.b16 %v1474, %v1472
    %v1505 = vpack.c.b16 %v1475, %v1473
    %v1506 = vpack.c.b16 %v1478, %v1476
    %v1507 = vpack.c.b16 %v1479, %v1477
    %v1508 = vpack.c.b16 %v1482, %v1480
    %v1509 = vpack.c.b16 %v1483, %v1481
    %v1510 = vpack.c.b16 %v1486, %v1484
    %v1511 = vpack.c.b16 %v1487, %v1485
    %v1512 = vpack.c.b16 %v1490, %v1488
    %v1513 = vpack.c.b16 %v1491, %v1489
    %v1514 = vpack.c.b16 %v1494, %v1492
    %v1515 = vpack.c.b16 %v1495, %v1493
    %v1516 = vpack.c.b16 %v1498, %v1496
    %v1517 = vpack.c.b16 %v1499, %v1497
    %v1518 = vpack.c.b16 %v1502, %v1500
    %v1519 = vpack.c.b16 %v1503, %v1501
    %1536 = vmatprep.subr.bf16.mxu0 %v1519
    %1537 = vmatpush1.bf16.msra.mxu0 %v1518
    %1538 = vmatprep.subr.bf16.mxu0 %v1517
    %1539 = vmatpush1.bf16.msra.mxu0 %v1516
    %1540 = vmatprep.subr.bf16.mxu0 %v1515
    %1541 = vmatpush1.bf16.msra.mxu0 %v1514
    %1542 = vmatprep.subr.bf16.mxu0 %v1513
    %1543 = vmatpush1.bf16.msra.mxu0 %v1512
    %1544 = vmatprep.subr.bf16.mxu0 %v1511
    %1545 = vmatpush1.bf16.msra.mxu0 %v1510
    %1546 = vmatprep.subr.bf16.mxu0 %v1509
    %1547 = vmatpush1.bf16.msra.mxu0 %v1508
    %1548 = vmatprep.subr.bf16.mxu0 %v1507
    %1549 = vmatpush1.bf16.msra.mxu0 %v1506
    %1550 = vmatprep.subr.bf16.mxu0 %v1505
    %1551 = vmatpush1.bf16.msra.mxu0 %v1504
    %1552 = vmatprep.subr.bf16.mxu0 0
    %1553 = vmatpush2.bf16.msra.mxu0 0
    %1554 = vmatprep.subr.bf16.mxu0 0
    %1555 = vmatpush2.bf16.msra.mxu0 0
    %1556 = vmatprep.subr.bf16.mxu0 0
    %1557 = vmatpush2.bf16.msra.mxu0 0
    %1558 = vmatprep.subr.bf16.mxu0 0
    %1559 = vmatpush2.bf16.msra.mxu0 0
    %1560 = vmatprep.subr.bf16.mxu0 0
    %1561 = vmatpush2.bf16.msra.mxu0 0
    %1562 = vmatprep.subr.bf16.mxu0 0
    %1563 = vmatpush2.bf16.msra.mxu0 0
    %1564 = vmatprep.subr.bf16.mxu0 0
    %1565 = vmatpush2.bf16.msra.mxu0 0
    %1566 = vmatprep.subr.bf16.mxu0 0
    %1567 = vmatpush2.bf16.msra.mxu0 0
    %1568 = vmatprep.mubr.bf16.mxu0 0
    %1569 = vmatmul.mubr.bf16.gmra.mxu0 %v1427
    %v1570 = vpop.f32.mrf.mxu0
    %v1571 = vadd.f32 %v1449, %v1570
    %v1572 = vpop.f32.mrf.mxu0
    %v1573 = vadd.f32 %v1453, %v1572
    %v1574 = vpop.f32.mrf.mxu0
    %v1575 = vadd.f32 %v1449, %v1574
    %v1576 = vpop.f32.mrf.mxu0
    %v1577 = vadd.f32 %v1453, %v1576
    %1578 = vdwg.mxu0
    %v1579 = vmax.f32 %v1571, 0.0
    %v1580 = vmax.f32 %v1573, 0.0
    %v1581 = vmax.f32 %v1575, 0.0
    %v1582 = vmax.f32 %v1577, 0.0
    %v1583 = vpack.c.bf16 %v1581, %v1579
    %v1584 = vpack.c.bf16 %v1582, %v1580
    %v1585 = vld [vmem:[#allocation9] sm:$0xff]
    %v1586 = vld [vmem:[#allocation9 + $0x8] sm:$0xff]
    %v1587 = vld [vmem:[#allocation9 + $0x10] sm:$0xff]
    %v1588 = vld [vmem:[#allocation9 + $0x18] sm:$0xf]
    %v1589 = vld [vmem:[#allocation9 + $0x1c] sm:$0xff]
    %v1590 = vld [vmem:[#allocation9 + $0x24] sm:$0xff]
    %v1591 = vld [vmem:[#allocation9 + $0x2c] sm:$0xff]
    %v1592 = vld [vmem:[#allocation9 + $0x34] sm:$0xf]
    %v1593 = vld [vmem:[#allocation9 + $0x38] sm:$0xff]
    %v1594 = vld [vmem:[#allocation9 + $0x40] sm:$0xff]
    %v1595 = vld [vmem:[#allocation9 + $0x48] sm:$0xff]
    %v1596 = vld [vmem:[#allocation9 + $0x50] sm:$0xf]
    %v1597 = vld [vmem:[#allocation9 + $0x54] sm:$0xff]
    %v1598 = vld [vmem:[#allocation9 + $0x5c] sm:$0xff]
    %v1599 = vld [vmem:[#allocation9 + $0x64] sm:$0xff]
    %v1600 = vld [vmem:[#allocation9 + $0x6c] sm:$0xf]
    %v1601 = vld [vmem:[#allocation9 + $0x70] sm:$0xff]
    %v1602 = vld [vmem:[#allocation9 + $0x78] sm:$0xff]
    %v1603 = vld [vmem:[#allocation9 + $0x80] sm:$0xff]
    %v1604 = vld [vmem:[#allocation9 + $0x88] sm:$0xf]
    %v1605 = vld [vmem:[#allocation9 + $0x8c] sm:$0xff]
    %v1606 = vld [vmem:[#allocation9 + $0x94] sm:$0xff]
    %v1607 = vld [vmem:[#allocation9 + $0x9c] sm:$0xff]
    %v1608 = vld [vmem:[#allocation9 + $0xa4] sm:$0xf]
    %v1609 = vld [vmem:[#allocation9 + $0xa8] sm:$0xff]
    %v1610 = vld [vmem:[#allocation9 + $0xb0] sm:$0xff]
    %v1611 = vld [vmem:[#allocation9 + $0xb8] sm:$0xff]
    %v1612 = vld [vmem:[#allocation9 + $0xc0] sm:$0xf]
    %v1613 = vld [vmem:[#allocation9 + $0xc4] sm:$0xff]
    %v1614 = vld [vmem:[#allocation9 + $0xcc] sm:$0xff]
    %v1615 = vld [vmem:[#allocation9 + $0xd4] sm:$0xff]
    %v1616 = vld [vmem:[#allocation9 + $0xdc] sm:$0xf]
    %v1617 = vld [vmem:[#allocation9 + $0xe0] sm:$0xff]
    %v1618 = vld [vmem:[#allocation9 + $0xe8] sm:$0xff]
    %v1619 = vld [vmem:[#allocation9 + $0xf0] sm:$0xff]
    %v1620 = vld [vmem:[#allocation9 + $0xf8] sm:$0xf]
    %v1621 = vld [vmem:[#allocation9 + $0xfc] sm:$0xff]
    %v1622 = vld [vmem:[#allocation9 + $0x104] sm:$0xff]
    %v1623 = vld [vmem:[#allocation9 + $0x10c] sm:$0xff]
    %v1624 = vld [vmem:[#allocation9 + $0x114] sm:$0xf]
    %v1625 = vld [vmem:[#allocation9 + $0x118] sm:$0xff]
    %v1626 = vld [vmem:[#allocation9 + $0x120] sm:$0xff]
    %v1627 = vld [vmem:[#allocation9 + $0x128] sm:$0xff]
    %v1628 = vld [vmem:[#allocation9 + $0x130] sm:$0xf]
    %v1629 = vld [vmem:[#allocation9 + $0x134] sm:$0xff]
    %v1630 = vld [vmem:[#allocation9 + $0x13c] sm:$0xff]
    %v1631 = vld [vmem:[#allocation9 + $0x144] sm:$0xff]
    %v1632 = vld [vmem:[#allocation9 + $0x14c] sm:$0xf]
    %v1633 = vld [vmem:[#allocation9 + $0x150] sm:$0xff]
    %v1634 = vld [vmem:[#allocation9 + $0x158] sm:$0xff]
    %v1635 = vld [vmem:[#allocation9 + $0x160] sm:$0xff]
    %v1636 = vld [vmem:[#allocation9 + $0x168] sm:$0xf]
    %v1637 = vld [vmem:[#allocation9 + $0x16c] sm:$0xff]
    %v1638 = vld [vmem:[#allocation9 + $0x174] sm:$0xff]
    %v1639 = vld [vmem:[#allocation9 + $0x17c] sm:$0xff]
    %v1640 = vld [vmem:[#allocation9 + $0x184] sm:$0xf]
    %v1641 = vld [vmem:[#allocation9 + $0x188] sm:$0xff]
    %v1642 = vld [vmem:[#allocation9 + $0x190] sm:$0xff]
    %v1643 = vld [vmem:[#allocation9 + $0x198] sm:$0xff]
    %v1644 = vld [vmem:[#allocation9 + $0x1a0] sm:$0xf]
    %v1645 = vld [vmem:[#allocation9 + $0x1a4] sm:$0xff]
    %v1646 = vld [vmem:[#allocation9 + $0x1ac] sm:$0xff]
    %v1647 = vld [vmem:[#allocation9 + $0x1b4] sm:$0xff]
    %v1648 = vld [vmem:[#allocation9 + $0x1bc] sm:$0xf]
    %v1649 = vld [vmem:[#allocation9 + $0x1c0] sm:$0xff]
    %v1650 = vld [vmem:[#allocation9 + $0x1c8] sm:$0xff]
    %v1651 = vld [vmem:[#allocation9 + $0x1d0] sm:$0xff]
    %v1652 = vld [vmem:[#allocation9 + $0x1d8] sm:$0xf]
    %v1653 = vld [vmem:[#allocation9 + $0x1dc] sm:$0xff]
    %v1654 = vld [vmem:[#allocation9 + $0x1e4] sm:$0xff]
    %v1655 = vld [vmem:[#allocation9 + $0x1ec] sm:$0xff]
    %v1656 = vld [vmem:[#allocation9 + $0x1f4] sm:$0xf]
    %v1657 = vld [vmem:[#allocation9 + $0x1f8] sm:$0xff]
    %v1658 = vld [vmem:[#allocation9 + $0x200] sm:$0xff]
    %v1659 = vld [vmem:[#allocation9 + $0x208] sm:$0xff]
    %v1660 = vld [vmem:[#allocation9 + $0x210] sm:$0xf]
    %v1661 = vld [vmem:[#allocation9 + $0x214] sm:$0xff]
    %v1662 = vld [vmem:[#allocation9 + $0x21c] sm:$0xff]
    %v1663 = vld [vmem:[#allocation9 + $0x224] sm:$0xff]
    %v1664 = vld [vmem:[#allocation9 + $0x22c] sm:$0xf]
    %v1665 = vld [vmem:[#allocation9 + $0x230] sm:$0xff]
    %v1666 = vld [vmem:[#allocation9 + $0x238] sm:$0xff]
    %v1667 = vld [vmem:[#allocation9 + $0x240] sm:$0xff]
    %v1668 = vld [vmem:[#allocation9 + $0x248] sm:$0xf]
    %v1669 = vld [vmem:[#allocation9 + $0x24c] sm:$0xff]
    %v1670 = vld [vmem:[#allocation9 + $0x254] sm:$0xff]
    %v1671 = vld [vmem:[#allocation9 + $0x25c] sm:$0xff]
    %v1672 = vld [vmem:[#allocation9 + $0x264] sm:$0xf]
    %v1673 = vld [vmem:[#allocation9 + $0x268] sm:$0xff]
    %v1674 = vld [vmem:[#allocation9 + $0x270] sm:$0xff]
    %v1675 = vld [vmem:[#allocation9 + $0x278] sm:$0xff]
    %v1676 = vld [vmem:[#allocation9 + $0x280] sm:$0xf]
    %v1677 = vld [vmem:[#allocation9 + $0x284] sm:$0xff]
    %v1678 = vld [vmem:[#allocation9 + $0x28c] sm:$0xff]
    %v1679 = vld [vmem:[#allocation9 + $0x294] sm:$0xff]
    %v1680 = vld [vmem:[#allocation9 + $0x29c] sm:$0xf]
    %v1681 = vld [vmem:[#allocation9 + $0x2a0] sm:$0xff]
    %v1682 = vld [vmem:[#allocation9 + $0x2a8] sm:$0xff]
    %v1683 = vld [vmem:[#allocation9 + $0x2b0] sm:$0xff]
    %v1684 = vld [vmem:[#allocation9 + $0x2b8] sm:$0xf]
    %v1685 = vld [vmem:[#allocation9 + $0x2bc] sm:$0xff]
    %v1686 = vld [vmem:[#allocation9 + $0x2c4] sm:$0xff]
    %v1687 = vld [vmem:[#allocation9 + $0x2cc] sm:$0xff]
    %v1688 = vld [vmem:[#allocation9 + $0x2d4] sm:$0xf]
    %v1689 = vld [vmem:[#allocation9 + $0x2d8] sm:$0xff]
    %v1690 = vld [vmem:[#allocation9 + $0x2e0] sm:$0xff]
    %v1691 = vld [vmem:[#allocation9 + $0x2e8] sm:$0xff]
    %v1692 = vld [vmem:[#allocation9 + $0x2f0] sm:$0xf]
    %v1693 = vld [vmem:[#allocation9 + $0x2f4] sm:$0xff]
    %v1694 = vld [vmem:[#allocation9 + $0x2fc] sm:$0xff]
    %v1695 = vld [vmem:[#allocation9 + $0x304] sm:$0xff]
    %v1696 = vld [vmem:[#allocation9 + $0x30c] sm:$0xf]
    %v1697 = vld [vmem:[#allocation9 + $0x310] sm:$0xff]
    %v1698 = vld [vmem:[#allocation9 + $0x318] sm:$0xff]
    %v1699 = vld [vmem:[#allocation9 + $0x320] sm:$0xff]
    %v1700 = vld [vmem:[#allocation9 + $0x328] sm:$0xf]
    %v1701 = vld [vmem:[#allocation9 + $0x32c] sm:$0xff]
    %v1702 = vld [vmem:[#allocation9 + $0x334] sm:$0xff]
    %v1703 = vld [vmem:[#allocation9 + $0x33c] sm:$0xff]
    %v1704 = vld [vmem:[#allocation9 + $0x344] sm:$0xf]
    %v1705 = vld [vmem:[#allocation9 + $0x348] sm:$0xff]
    %v1706 = vld [vmem:[#allocation9 + $0x350] sm:$0xff]
    %v1707 = vld [vmem:[#allocation9 + $0x358] sm:$0xff]
    %v1708 = vld [vmem:[#allocation9 + $0x360] sm:$0xf]
    %v1709 = vld [vmem:[#allocation9 + $0x364] sm:$0xff]
    %v1710 = vld [vmem:[#allocation9 + $0x36c] sm:$0xff]
    %v1711 = vld [vmem:[#allocation9 + $0x374] sm:$0xff]
    %v1712 = vld [vmem:[#allocation9 + $0x37c] sm:$0xf]
    %v1713 = vld [vmem:[%s12] sm:$0xff]
    %v1715 = vlaneseq
    %v1716 = vshrl.u32 %v1715, 7
    %v1717 = vsub.s32 0, %v1716
    %v1718 = vrot.slane %v1713, %v1717
    %v1719 = vlaneseq
    %v1720 = vshrl.u32 %v1719, 7
    %v1721 = vsub.s32 1, %v1720
    %v1722 = vrot.slane %v1713, %v1721
    %v1723 = vlaneseq
    %v1724 = vshrl.u32 %v1723, 7
    %v1725 = vsub.s32 2, %v1724
    %v1726 = vrot.slane %v1713, %v1725
    %v1727 = vlaneseq
    %v1728 = vshrl.u32 %v1727, 7
    %v1729 = vsub.s32 3, %v1728
    %v1730 = vrot.slane %v1713, %v1729
    %v1731 = vlaneseq
    %v1732 = vshrl.u32 %v1731, 7
    %v1733 = vsub.s32 4, %v1732
    %v1734 = vrot.slane %v1713, %v1733
    %v1735 = vlaneseq
    %v1736 = vshrl.u32 %v1735, 7
    %v1737 = vsub.s32 5, %v1736
    %v1738 = vrot.slane %v1713, %v1737
    %v1739 = vlaneseq
    %v1740 = vshrl.u32 %v1739, 7
    %v1741 = vsub.s32 6, %v1740
    %v1742 = vrot.slane %v1713, %v1741
    %v1878 = vunpack.c.l.b16 %v1585
    %v1879 = vunpack.c.h.b16 %v1585
    %v1880 = vunpack.c.l.b16 %v1586
    %v1881 = vunpack.c.h.b16 %v1586
    %v1882 = vunpack.c.l.b16 %v1587
    %v1883 = vunpack.c.h.b16 %v1587
    %v1884 = vunpack.c.l.b16 %v1588
    %v1885 = vunpack.c.l.b16 %v1589
    %v1886 = vunpack.c.h.b16 %v1589
    %v1887 = vunpack.c.l.b16 %v1590
    %v1888 = vunpack.c.h.b16 %v1590
    %v1889 = vunpack.c.l.b16 %v1591
    %v1890 = vunpack.c.h.b16 %v1591
    %v1891 = vunpack.c.l.b16 %v1592
    %v1892 = vunpack.c.l.b16 %v1593
    %v1893 = vunpack.c.h.b16 %v1593
    %v1894 = vunpack.c.l.b16 %v1594
    %v1895 = vunpack.c.h.b16 %v1594
    %v1896 = vunpack.c.l.b16 %v1595
    %v1897 = vunpack.c.h.b16 %v1595
    %v1898 = vunpack.c.l.b16 %v1596
    %v1899 = vunpack.c.l.b16 %v1597
    %v1900 = vunpack.c.h.b16 %v1597
    %v1901 = vunpack.c.l.b16 %v1598
    %v1902 = vunpack.c.h.b16 %v1598
    %v1903 = vunpack.c.l.b16 %v1599
    %v1904 = vunpack.c.h.b16 %v1599
    %v1905 = vunpack.c.l.b16 %v1600
    %v1906 = vunpack.c.l.b16 %v1601
    %v1907 = vunpack.c.h.b16 %v1601
    %v1908 = vunpack.c.l.b16 %v1602
    %v1909 = vunpack.c.h.b16 %v1602
    %v1910 = vunpack.c.l.b16 %v1603
    %v1911 = vunpack.c.h.b16 %v1603
    %v1912 = vunpack.c.l.b16 %v1604
    %v1913 = vunpack.c.l.b16 %v1605
    %v1914 = vunpack.c.h.b16 %v1605
    %v1915 = vunpack.c.l.b16 %v1606
    %v1916 = vunpack.c.h.b16 %v1606
    %v1917 = vunpack.c.l.b16 %v1607
    %v1918 = vunpack.c.h.b16 %v1607
    %v1919 = vunpack.c.l.b16 %v1608
    %v1920 = vunpack.c.l.b16 %v1609
    %v1921 = vunpack.c.h.b16 %v1609
    %v1922 = vunpack.c.l.b16 %v1610
    %v1923 = vunpack.c.h.b16 %v1610
    %v1924 = vunpack.c.l.b16 %v1611
    %v1925 = vunpack.c.h.b16 %v1611
    %v1926 = vunpack.c.l.b16 %v1612
    %v1927 = vunpack.c.l.b16 %v1613
    %v1928 = vunpack.c.h.b16 %v1613
    %v1929 = vunpack.c.l.b16 %v1614
    %v1930 = vunpack.c.h.b16 %v1614
    %v1931 = vunpack.c.l.b16 %v1615
    %v1932 = vunpack.c.h.b16 %v1615
    %v1933 = vunpack.c.l.b16 %v1616
    %v1934 = vunpack.c.l.b16 %v1617
    %v1935 = vunpack.c.h.b16 %v1617
    %v1936 = vunpack.c.l.b16 %v1618
    %v1937 = vunpack.c.h.b16 %v1618
    %v1938 = vunpack.c.l.b16 %v1619
    %v1939 = vunpack.c.h.b16 %v1619
    %v1940 = vunpack.c.l.b16 %v1620
    %v1941 = vunpack.c.l.b16 %v1621
    %v1942 = vunpack.c.h.b16 %v1621
    %v1943 = vunpack.c.l.b16 %v1622
    %v1944 = vunpack.c.h.b16 %v1622
    %v1945 = vunpack.c.l.b16 %v1623
    %v1946 = vunpack.c.h.b16 %v1623
    %v1947 = vunpack.c.l.b16 %v1624
    %v1948 = vunpack.c.l.b16 %v1625
    %v1949 = vunpack.c.h.b16 %v1625
    %v1950 = vunpack.c.l.b16 %v1626
    %v1951 = vunpack.c.h.b16 %v1626
    %v1952 = vunpack.c.l.b16 %v1627
    %v1953 = vunpack.c.h.b16 %v1627
    %v1954 = vunpack.c.l.b16 %v1628
    %v1955 = vunpack.c.l.b16 %v1629
    %v1956 = vunpack.c.h.b16 %v1629
    %v1957 = vunpack.c.l.b16 %v1630
    %v1958 = vunpack.c.h.b16 %v1630
    %v1959 = vunpack.c.l.b16 %v1631
    %v1960 = vunpack.c.h.b16 %v1631
    %v1961 = vunpack.c.l.b16 %v1632
    %v1962 = vunpack.c.l.b16 %v1633
    %v1963 = vunpack.c.h.b16 %v1633
    %v1964 = vunpack.c.l.b16 %v1634
    %v1965 = vunpack.c.h.b16 %v1634
    %v1966 = vunpack.c.l.b16 %v1635
    %v1967 = vunpack.c.h.b16 %v1635
    %v1968 = vunpack.c.l.b16 %v1636
    %v1969 = vunpack.c.l.b16 %v1637
    %v1970 = vunpack.c.h.b16 %v1637
    %v1971 = vunpack.c.l.b16 %v1638
    %v1972 = vunpack.c.h.b16 %v1638
    %v1973 = vunpack.c.l.b16 %v1639
    %v1974 = vunpack.c.h.b16 %v1639
    %v1975 = vunpack.c.l.b16 %v1640
    %v1976 = vunpack.c.l.b16 %v1641
    %v1977 = vunpack.c.h.b16 %v1641
    %v1978 = vunpack.c.l.b16 %v1642
    %v1979 = vunpack.c.h.b16 %v1642
    %v1980 = vunpack.c.l.b16 %v1643
    %v1981 = vunpack.c.h.b16 %v1643
    %v1982 = vunpack.c.l.b16 %v1644
    %v1983 = vunpack.c.l.b16 %v1645
    %v1984 = vunpack.c.h.b16 %v1645
    %v1985 = vunpack.c.l.b16 %v1646
    %v1986 = vunpack.c.h.b16 %v1646
    %v1987 = vunpack.c.l.b16 %v1647
    %v1988 = vunpack.c.h.b16 %v1647
    %v1989 = vunpack.c.l.b16 %v1648
    %v1990 = vunpack.c.l.b16 %v1649
    %v1991 = vunpack.c.h.b16 %v1649
    %v1992 = vunpack.c.l.b16 %v1650
    %v1993 = vunpack.c.h.b16 %v1650
    %v1994 = vunpack.c.l.b16 %v1651
    %v1995 = vunpack.c.h.b16 %v1651
    %v1996 = vunpack.c.l.b16 %v1652
    %v1997 = vunpack.c.l.b16 %v1653
    %v1998 = vunpack.c.h.b16 %v1653
    %v1999 = vunpack.c.l.b16 %v1654
    %v2000 = vunpack.c.h.b16 %v1654
    %v2001 = vunpack.c.l.b16 %v1655
    %v2002 = vunpack.c.h.b16 %v1655
    %v2003 = vunpack.c.l.b16 %v1656
    %v2004 = vunpack.c.l.b16 %v1657
    %v2005 = vunpack.c.h.b16 %v1657
    %v2006 = vunpack.c.l.b16 %v1658
    %v2007 = vunpack.c.h.b16 %v1658
    %v2008 = vunpack.c.l.b16 %v1659
    %v2009 = vunpack.c.h.b16 %v1659
    %v2010 = vunpack.c.l.b16 %v1660
    %v2011 = vunpack.c.l.b16 %v1661
    %v2012 = vunpack.c.h.b16 %v1661
    %v2013 = vunpack.c.l.b16 %v1662
    %v2014 = vunpack.c.h.b16 %v1662
    %v2015 = vunpack.c.l.b16 %v1663
    %v2016 = vunpack.c.h.b16 %v1663
    %v2017 = vunpack.c.l.b16 %v1664
    %v2018 = vunpack.c.l.b16 %v1665
    %v2019 = vunpack.c.h.b16 %v1665
    %v2020 = vunpack.c.l.b16 %v1666
    %v2021 = vunpack.c.h.b16 %v1666
    %v2022 = vunpack.c.l.b16 %v1667
    %v2023 = vunpack.c.h.b16 %v1667
    %v2024 = vunpack.c.l.b16 %v1668
    %v2025 = vunpack.c.l.b16 %v1669
    %v2026 = vunpack.c.h.b16 %v1669
    %v2027 = vunpack.c.l.b16 %v1670
    %v2028 = vunpack.c.h.b16 %v1670
    %v2029 = vunpack.c.l.b16 %v1671
    %v2030 = vunpack.c.h.b16 %v1671
    %v2031 = vunpack.c.l.b16 %v1672
    %v2032 = vunpack.c.l.b16 %v1673
    %v2033 = vunpack.c.h.b16 %v1673
    %v2034 = vunpack.c.l.b16 %v1674
    %v2035 = vunpack.c.h.b16 %v1674
    %v2036 = vunpack.c.l.b16 %v1675
    %v2037 = vunpack.c.h.b16 %v1675
    %v2038 = vunpack.c.l.b16 %v1676
    %v2039 = vunpack.c.l.b16 %v1677
    %v2040 = vunpack.c.h.b16 %v1677
    %v2041 = vunpack.c.l.b16 %v1678
    %v2042 = vunpack.c.h.b16 %v1678
    %v2043 = vunpack.c.l.b16 %v1679
    %v2044 = vunpack.c.h.b16 %v1679
    %v2045 = vunpack.c.l.b16 %v1680
    %v2046 = vunpack.c.l.b16 %v1681
    %v2047 = vunpack.c.h.b16 %v1681
    %v2048 = vunpack.c.l.b16 %v1682
    %v2049 = vunpack.c.h.b16 %v1682
    %v2050 = vunpack.c.l.b16 %v1683
    %v2051 = vunpack.c.h.b16 %v1683
    %v2052 = vunpack.c.l.b16 %v1684
    %v2053 = vunpack.c.l.b16 %v1685
    %v2054 = vunpack.c.h.b16 %v1685
    %v2055 = vunpack.c.l.b16 %v1686
    %v2056 = vunpack.c.h.b16 %v1686
    %v2057 = vunpack.c.l.b16 %v1687
    %v2058 = vunpack.c.h.b16 %v1687
    %v2059 = vunpack.c.l.b16 %v1688
    %v2060 = vunpack.c.l.b16 %v1689
    %v2061 = vunpack.c.h.b16 %v1689
    %v2062 = vunpack.c.l.b16 %v1690
    %v2063 = vunpack.c.h.b16 %v1690
    %v2064 = vunpack.c.l.b16 %v1691
    %v2065 = vunpack.c.h.b16 %v1691
    %v2066 = vunpack.c.l.b16 %v1692
    %v2067 = vunpack.c.l.b16 %v1693
    %v2068 = vunpack.c.h.b16 %v1693
    %v2069 = vunpack.c.l.b16 %v1694
    %v2070 = vunpack.c.h.b16 %v1694
    %v2071 = vunpack.c.l.b16 %v1695
    %v2072 = vunpack.c.h.b16 %v1695
    %v2073 = vunpack.c.l.b16 %v1696
    %v2074 = vunpack.c.l.b16 %v1697
    %v2075 = vunpack.c.h.b16 %v1697
    %v2076 = vunpack.c.l.b16 %v1698
    %v2077 = vunpack.c.h.b16 %v1698
    %v2078 = vunpack.c.l.b16 %v1699
    %v2079 = vunpack.c.h.b16 %v1699
    %v2080 = vunpack.c.l.b16 %v1700
    %v2081 = vunpack.c.l.b16 %v1701
    %v2082 = vunpack.c.h.b16 %v1701
    %v2083 = vunpack.c.l.b16 %v1702
    %v2084 = vunpack.c.h.b16 %v1702
    %v2085 = vunpack.c.l.b16 %v1703
    %v2086 = vunpack.c.h.b16 %v1703
    %v2087 = vunpack.c.l.b16 %v1704
    %v2088 = vunpack.c.l.b16 %v1705
    %v2089 = vunpack.c.h.b16 %v1705
    %v2090 = vunpack.c.l.b16 %v1706
    %v2091 = vunpack.c.h.b16 %v1706
    %v2092 = vunpack.c.l.b16 %v1707
    %v2093 = vunpack.c.h.b16 %v1707
    %v2094 = vunpack.c.l.b16 %v1708
    %v2095 = vunpack.c.l.b16 %v1709
    %v2096 = vunpack.c.h.b16 %v1709
    %v2097 = vunpack.c.l.b16 %v1710
    %v2098 = vunpack.c.h.b16 %v1710
    %v2099 = vunpack.c.l.b16 %v1711
    %v2100 = vunpack.c.h.b16 %v1711
    %v2101 = vunpack.c.l.b16 %v1712
    %v2102 = vpack.c.b16 %v1885, %v1878
    %v2103 = vpack.c.b16 %v1886, %v1879
    %v2104 = vpack.c.b16 %v1887, %v1880
    %v2105 = vpack.c.b16 %v1888, %v1881
    %v2106 = vpack.c.b16 %v1889, %v1882
    %v2107 = vpack.c.b16 %v1890, %v1883
    %v2108 = vpack.c.b16 %v1891, %v1884
    %v2109 = vpack.c.b16 %v1899, %v1892
    %v2110 = vpack.c.b16 %v1900, %v1893
    %v2111 = vpack.c.b16 %v1901, %v1894
    %v2112 = vpack.c.b16 %v1902, %v1895
    %v2113 = vpack.c.b16 %v1903, %v1896
    %v2114 = vpack.c.b16 %v1904, %v1897
    %v2115 = vpack.c.b16 %v1905, %v1898
    %v2116 = vpack.c.b16 %v1913, %v1906
    %v2117 = vpack.c.b16 %v1914, %v1907
    %v2118 = vpack.c.b16 %v1915, %v1908
    %v2119 = vpack.c.b16 %v1916, %v1909
    %v2120 = vpack.c.b16 %v1917, %v1910
    %v2121 = vpack.c.b16 %v1918, %v1911
    %v2122 = vpack.c.b16 %v1919, %v1912
    %v2123 = vpack.c.b16 %v1927, %v1920
    %v2124 = vpack.c.b16 %v1928, %v1921
    %v2125 = vpack.c.b16 %v1929, %v1922
    %v2126 = vpack.c.b16 %v1930, %v1923
    %v2127 = vpack.c.b16 %v1931, %v1924
    %v2128 = vpack.c.b16 %v1932, %v1925
    %v2129 = vpack.c.b16 %v1933, %v1926
    %v2130 = vpack.c.b16 %v1941, %v1934
    %v2131 = vpack.c.b16 %v1942, %v1935
    %v2132 = vpack.c.b16 %v1943, %v1936
    %v2133 = vpack.c.b16 %v1944, %v1937
    %v2134 = vpack.c.b16 %v1945, %v1938
    %v2135 = vpack.c.b16 %v1946, %v1939
    %v2136 = vpack.c.b16 %v1947, %v1940
    %v2137 = vpack.c.b16 %v1955, %v1948
    %v2138 = vpack.c.b16 %v1956, %v1949
    %v2139 = vpack.c.b16 %v1957, %v1950
    %v2140 = vpack.c.b16 %v1958, %v1951
    %v2141 = vpack.c.b16 %v1959, %v1952
    %v2142 = vpack.c.b16 %v1960, %v1953
    %v2143 = vpack.c.b16 %v1961, %v1954
    %v2144 = vpack.c.b16 %v1969, %v1962
    %v2145 = vpack.c.b16 %v1970, %v1963
    %v2146 = vpack.c.b16 %v1971, %v1964
    %v2147 = vpack.c.b16 %v1972, %v1965
    %v2148 = vpack.c.b16 %v1973, %v1966
    %v2149 = vpack.c.b16 %v1974, %v1967
    %v2150 = vpack.c.b16 %v1975, %v1968
    %v2151 = vpack.c.b16 %v1983, %v1976
    %v2152 = vpack.c.b16 %v1984, %v1977
    %v2153 = vpack.c.b16 %v1985, %v1978
    %v2154 = vpack.c.b16 %v1986, %v1979
    %v2155 = vpack.c.b16 %v1987, %v1980
    %v2156 = vpack.c.b16 %v1988, %v1981
    %v2157 = vpack.c.b16 %v1989, %v1982
    %v2158 = vpack.c.b16 %v1997, %v1990
    %v2159 = vpack.c.b16 %v1998, %v1991
    %v2160 = vpack.c.b16 %v1999, %v1992
    %v2161 = vpack.c.b16 %v2000, %v1993
    %v2162 = vpack.c.b16 %v2001, %v1994
    %v2163 = vpack.c.b16 %v2002, %v1995
    %v2164 = vpack.c.b16 %v2003, %v1996
    %v2165 = vpack.c.b16 %v2011, %v2004
    %v2166 = vpack.c.b16 %v2012, %v2005
    %v2167 = vpack.c.b16 %v2013, %v2006
    %v2168 = vpack.c.b16 %v2014, %v2007
    %v2169 = vpack.c.b16 %v2015, %v2008
    %v2170 = vpack.c.b16 %v2016, %v2009
    %v2171 = vpack.c.b16 %v2017, %v2010
    %v2172 = vpack.c.b16 %v2025, %v2018
    %v2173 = vpack.c.b16 %v2026, %v2019
    %v2174 = vpack.c.b16 %v2027, %v2020
    %v2175 = vpack.c.b16 %v2028, %v2021
    %v2176 = vpack.c.b16 %v2029, %v2022
    %v2177 = vpack.c.b16 %v2030, %v2023
    %v2178 = vpack.c.b16 %v2031, %v2024
    %v2179 = vpack.c.b16 %v2039, %v2032
    %v2180 = vpack.c.b16 %v2040, %v2033
    %v2181 = vpack.c.b16 %v2041, %v2034
    %v2182 = vpack.c.b16 %v2042, %v2035
    %v2183 = vpack.c.b16 %v2043, %v2036
    %v2184 = vpack.c.b16 %v2044, %v2037
    %v2185 = vpack.c.b16 %v2045, %v2038
    %v2186 = vpack.c.b16 %v2053, %v2046
    %v2187 = vpack.c.b16 %v2054, %v2047
    %v2188 = vpack.c.b16 %v2055, %v2048
    %v2189 = vpack.c.b16 %v2056, %v2049
    %v2190 = vpack.c.b16 %v2057, %v2050
    %v2191 = vpack.c.b16 %v2058, %v2051
    %v2192 = vpack.c.b16 %v2059, %v2052
    %v2193 = vpack.c.b16 %v2067, %v2060
    %v2194 = vpack.c.b16 %v2068, %v2061
    %v2195 = vpack.c.b16 %v2069, %v2062
    %v2196 = vpack.c.b16 %v2070, %v2063
    %v2197 = vpack.c.b16 %v2071, %v2064
    %v2198 = vpack.c.b16 %v2072, %v2065
    %v2199 = vpack.c.b16 %v2073, %v2066
    %v2200 = vpack.c.b16 %v2081, %v2074
    %v2201 = vpack.c.b16 %v2082, %v2075
    %v2202 = vpack.c.b16 %v2083, %v2076
    %v2203 = vpack.c.b16 %v2084, %v2077
    %v2204 = vpack.c.b16 %v2085, %v2078
    %v2205 = vpack.c.b16 %v2086, %v2079
    %v2206 = vpack.c.b16 %v2087, %v2080
    %v2207 = vpack.c.b16 %v2095, %v2088
    %v2208 = vpack.c.b16 %v2096, %v2089
    %v2209 = vpack.c.b16 %v2097, %v2090
    %v2210 = vpack.c.b16 %v2098, %v2091
    %v2211 = vpack.c.b16 %v2099, %v2092
    %v2212 = vpack.c.b16 %v2100, %v2093
    %v2213 = vpack.c.b16 %v2101, %v2094
    %2326 = vmatprep.subr.bf16.mxu0 %v2152
    %2327 = vmatpush1.bf16.msra.mxu0 %v2151
    %2328 = vmatprep.subr.bf16.mxu0 %v2145
    %2329 = vmatpush1.bf16.msra.mxu0 %v2144
    %2330 = vmatprep.subr.bf16.mxu0 %v2138
    %2331 = vmatpush1.bf16.msra.mxu0 %v2137
    %2332 = vmatprep.subr.bf16.mxu0 %v2131
    %2333 = vmatpush1.bf16.msra.mxu0 %v2130
    %2334 = vmatprep.subr.bf16.mxu0 %v2124
    %2335 = vmatpush1.bf16.msra.mxu0 %v2123
    %2336 = vmatprep.subr.bf16.mxu0 %v2117
    %2337 = vmatpush1.bf16.msra.mxu0 %v2116
    %2338 = vmatprep.subr.bf16.mxu0 %v2110
    %2339 = vmatpush1.bf16.msra.mxu0 %v2109
    %2340 = vmatprep.subr.bf16.mxu0 %v2103
    %2341 = vmatpush1.bf16.msra.mxu0 %v2102
    %2342 = vmatprep.subr.bf16.mxu0 %v2208
    %2343 = vmatpush2.bf16.msra.mxu0 %v2207
    %2344 = vmatprep.subr.bf16.mxu0 %v2201
    %2345 = vmatpush2.bf16.msra.mxu0 %v2200
    %2346 = vmatprep.subr.bf16.mxu0 %v2194
    %2347 = vmatpush2.bf16.msra.mxu0 %v2193
    %2348 = vmatprep.subr.bf16.mxu0 %v2187
    %2349 = vmatpush2.bf16.msra.mxu0 %v2186
    %2350 = vmatprep.subr.bf16.mxu0 %v2180
    %2351 = vmatpush2.bf16.msra.mxu0 %v2179
    %2352 = vmatprep.subr.bf16.mxu0 %v2173
    %2353 = vmatpush2.bf16.msra.mxu0 %v2172
    %2354 = vmatprep.subr.bf16.mxu0 %v2166
    %2355 = vmatpush2.bf16.msra.mxu0 %v2165
    %2356 = vmatprep.subr.bf16.mxu0 %v2159
    %2357 = vmatpush2.bf16.msra.mxu0 %v2158
    %2358 = vmatprep.mubr.bf16.mxu0 %v1584
    %2359 = vmatmul.mubr.bf16.gmra.mxu0 %v1583
    %v2360 = vpop.f32.mrf.mxu0
    %v2361 = vadd.f32 %v1718, %v2360
    %v2362 = vpop.f32.mrf.mxu0
    %v2363 = vadd.f32 %v1722, %v2362
    %v2364 = vpop.f32.mrf.mxu0
    %v2365 = vadd.f32 %v1718, %v2364
    %v2366 = vpop.f32.mrf.mxu0
    %v2367 = vadd.f32 %v1722, %v2366
    %2368 = vdwg.mxu0
    %2369 = vmatprep.subr.bf16.mxu0 %v2154
    %2370 = vmatpush1.bf16.msra.mxu0 %v2153
    %2371 = vmatprep.subr.bf16.mxu0 %v2147
    %2372 = vmatpush1.bf16.msra.mxu0 %v2146
    %2373 = vmatprep.subr.bf16.mxu0 %v2140
    %2374 = vmatpush1.bf16.msra.mxu0 %v2139
    %2375 = vmatprep.subr.bf16.mxu0 %v2133
    %2376 = vmatpush1.bf16.msra.mxu0 %v2132
    %2377 = vmatprep.subr.bf16.mxu0 %v2126
    %2378 = vmatpush1.bf16.msra.mxu0 %v2125
    %2379 = vmatprep.subr.bf16.mxu0 %v2119
    %2380 = vmatpush1.bf16.msra.mxu0 %v2118
    %2381 = vmatprep.subr.bf16.mxu0 %v2112
    %2382 = vmatpush1.bf16.msra.mxu0 %v2111
    %2383 = vmatprep.subr.bf16.mxu0 %v2105
    %2384 = vmatpush1.bf16.msra.mxu0 %v2104
    %2385 = vmatprep.subr.bf16.mxu0 %v2210
    %2386 = vmatpush2.bf16.msra.mxu0 %v2209
    %2387 = vmatprep.subr.bf16.mxu0 %v2203
    %2388 = vmatpush2.bf16.msra.mxu0 %v2202
    %2389 = vmatprep.subr.bf16.mxu0 %v2196
    %2390 = vmatpush2.bf16.msra.mxu0 %v2195
    %2391 = vmatprep.subr.bf16.mxu0 %v2189
    %2392 = vmatpush2.bf16.msra.mxu0 %v2188
    %2393 = vmatprep.subr.bf16.mxu0 %v2182
    %2394 = vmatpush2.bf16.msra.mxu0 %v2181
    %2395 = vmatprep.subr.bf16.mxu0 %v2175
    %2396 = vmatpush2.bf16.msra.mxu0 %v2174
    %2397 = vmatprep.subr.bf16.mxu0 %v2168
    %2398 = vmatpush2.bf16.msra.mxu0 %v2167
    %2399 = vmatprep.subr.bf16.mxu0 %v2161
    %2400 = vmatpush2.bf16.msra.mxu0 %v2160
    %2401 = vmatprep.mubr.bf16.mxu0 %v1584
    %2402 = vmatmul.mubr.bf16.gmra.mxu0 %v1583
    %v2403 = vpop.f32.mrf.mxu0
    %v2404 = vadd.f32 %v1726, %v2403
    %v2405 = vpop.f32.mrf.mxu0
    %v2406 = vadd.f32 %v1730, %v2405
    %v2407 = vpop.f32.mrf.mxu0
    %v2408 = vadd.f32 %v1726, %v2407
    %v2409 = vpop.f32.mrf.mxu0
    %v2410 = vadd.f32 %v1730, %v2409
    %2411 = vdwg.mxu0
    %2412 = vmatprep.subr.bf16.mxu0 %v2156
    %2413 = vmatpush1.bf16.msra.mxu0 %v2155
    %2414 = vmatprep.subr.bf16.mxu0 %v2149
    %2415 = vmatpush1.bf16.msra.mxu0 %v2148
    %2416 = vmatprep.subr.bf16.mxu0 %v2142
    %2417 = vmatpush1.bf16.msra.mxu0 %v2141
    %2418 = vmatprep.subr.bf16.mxu0 %v2135
    %2419 = vmatpush1.bf16.msra.mxu0 %v2134
    %2420 = vmatprep.subr.bf16.mxu0 %v2128
    %2421 = vmatpush1.bf16.msra.mxu0 %v2127
    %2422 = vmatprep.subr.bf16.mxu0 %v2121
    %2423 = vmatpush1.bf16.msra.mxu0 %v2120
    %2424 = vmatprep.subr.bf16.mxu0 %v2114
    %2425 = vmatpush1.bf16.msra.mxu0 %v2113
    %2426 = vmatprep.subr.bf16.mxu0 %v2107
    %2427 = vmatpush1.bf16.msra.mxu0 %v2106
    %2428 = vmatprep.subr.bf16.mxu0 %v2212
    %2429 = vmatpush2.bf16.msra.mxu0 %v2211
    %2430 = vmatprep.subr.bf16.mxu0 %v2205
    %2431 = vmatpush2.bf16.msra.mxu0 %v2204
    %2432 = vmatprep.subr.bf16.mxu0 %v2198
    %2433 = vmatpush2.bf16.msra.mxu0 %v2197
    %2434 = vmatprep.subr.bf16.mxu0 %v2191
    %2435 = vmatpush2.bf16.msra.mxu0 %v2190
    %2436 = vmatprep.subr.bf16.mxu0 %v2184
    %2437 = vmatpush2.bf16.msra.mxu0 %v2183
    %2438 = vmatprep.subr.bf16.mxu0 %v2177
    %2439 = vmatpush2.bf16.msra.mxu0 %v2176
    %2440 = vmatprep.subr.bf16.mxu0 %v2170
    %2441 = vmatpush2.bf16.msra.mxu0 %v2169
    %2442 = vmatprep.subr.bf16.mxu0 %v2163
    %2443 = vmatpush2.bf16.msra.mxu0 %v2162
    %2444 = vmatprep.mubr.bf16.mxu0 %v1584
    %2445 = vmatmul.mubr.bf16.gmra.mxu0 %v1583
    %v2446 = vpop.f32.mrf.mxu0
    %v2447 = vadd.f32 %v1734, %v2446
    %v2448 = vpop.f32.mrf.mxu0
    %v2449 = vadd.f32 %v1738, %v2448
    %v2450 = vpop.f32.mrf.mxu0
    %v2451 = vadd.f32 %v1734, %v2450
    %v2452 = vpop.f32.mrf.mxu0
    %v2453 = vadd.f32 %v1738, %v2452
    %2454 = vdwg.mxu0
    %2455 = vmatprep.subr.bf16.mxu0 0
    %2456 = vmatpush1.bf16.msra.mxu0 %v2157
    %2457 = vmatprep.subr.bf16.mxu0 0
    %2458 = vmatpush1.bf16.msra.mxu0 %v2150
    %2459 = vmatprep.subr.bf16.mxu0 0
    %2460 = vmatpush1.bf16.msra.mxu0 %v2143
    %2461 = vmatprep.subr.bf16.mxu0 0
    %2462 = vmatpush1.bf16.msra.mxu0 %v2136
    %2463 = vmatprep.subr.bf16.mxu0 0
    %2464 = vmatpush1.bf16.msra.mxu0 %v2129
    %2465 = vmatprep.subr.bf16.mxu0 0
    %2466 = vmatpush1.bf16.msra.mxu0 %v2122
    %2467 = vmatprep.subr.bf16.mxu0 0
    %2468 = vmatpush1.bf16.msra.mxu0 %v2115
    %2469 = vmatprep.subr.bf16.mxu0 0
    %2470 = vmatpush1.bf16.msra.mxu0 %v2108
    %2471 = vmatprep.subr.bf16.mxu0 0
    %2472 = vmatpush2.bf16.msra.mxu0 %v2213
    %2473 = vmatprep.subr.bf16.mxu0 0
    %2474 = vmatpush2.bf16.msra.mxu0 %v2206
    %2475 = vmatprep.subr.bf16.mxu0 0
    %2476 = vmatpush2.bf16.msra.mxu0 %v2199
    %2477 = vmatprep.subr.bf16.mxu0 0
    %2478 = vmatpush2.bf16.msra.mxu0 %v2192
    %2479 = vmatprep.subr.bf16.mxu0 0
    %2480 = vmatpush2.bf16.msra.mxu0 %v2185
    %2481 = vmatprep.subr.bf16.mxu0 0
    %2482 = vmatpush2.bf16.msra.mxu0 %v2178
    %2483 = vmatprep.subr.bf16.mxu0 0
    %2484 = vmatpush2.bf16.msra.mxu0 %v2171
    %2485 = vmatprep.subr.bf16.mxu0 0
    %2486 = vmatpush2.bf16.msra.mxu0 %v2164
    %2487 = vmatprep.mubr.bf16.mxu0 %v1584
    %2488 = vmatmul.mubr.bf16.gmra.mxu0 %v1583
    %v2489 = vpop.f32.mrf.mxu0
    %v2490 = vadd.f32 %v1742, %v2489
    %v2491 = vpop.f32.mrf.mxu0
    %v2492 = vpop.f32.mrf.mxu0
    %v2493 = vadd.f32 %v1742, %v2492
    %v2494 = vpop.f32.mrf.mxu0
    %2495 = vdwg.mxu0
    %v2496 = vsub.f32 0.0, %v2361
    %v2497 = vsub.f32 0.0, %v2363
    %v2498 = vsub.f32 0.0, %v2404
    %v2499 = vsub.f32 0.0, %v2406
    %v2500 = vsub.f32 0.0, %v2447
    %v2501 = vsub.f32 0.0, %v2449
    %v2502 = vsub.f32 0.0, %v2490
    %v2503 = vsub.f32 0.0, %v2365
    %v2504 = vsub.f32 0.0, %v2367
    %v2505 = vsub.f32 0.0, %v2408
    %v2506 = vsub.f32 0.0, %v2410
    %v2507 = vsub.f32 0.0, %v2451
    %v2508 = vsub.f32 0.0, %v2453
    %v2509 = vsub.f32 0.0, %v2493
    %v2510 = vmul.f32 %v2496, 1.442695
    %v2511 = vpow.pop %v2510
    %v2512 = vmul.f32 %v2497, 1.442695
    %v2513 = vpow.pop %v2512
    %v2514 = vmul.f32 %v2498, 1.442695
    %v2515 = vpow.pop %v2514
    %v2516 = vmul.f32 %v2499, 1.442695
    %v2517 = vpow.pop %v2516
    %v2518 = vmul.f32 %v2500, 1.442695
    %v2519 = vpow.pop %v2518
    %v2520 = vmul.f32 %v2501, 1.442695
    %v2521 = vpow.pop %v2520
    %v2522 = vmul.f32 %v2502, 1.442695
    %v2523 = vpow.pop %v2522
    %v2524 = vmul.f32 %v2503, 1.442695
    %v2525 = vpow.pop %v2524
    %v2526 = vmul.f32 %v2504, 1.442695
    %v2527 = vpow.pop %v2526
    %v2528 = vmul.f32 %v2505, 1.442695
    %v2529 = vpow.pop %v2528
    %v2530 = vmul.f32 %v2506, 1.442695
    %v2531 = vpow.pop %v2530
    %v2532 = vmul.f32 %v2507, 1.442695
    %v2533 = vpow.pop %v2532
    %v2534 = vmul.f32 %v2508, 1.442695
    %v2535 = vpow.pop %v2534
    %v2536 = vmul.f32 %v2509, 1.442695
    %v2537 = vpow.pop %v2536
    %v2538 = vadd.f32 %v2511, 1.0
    %v2539 = vadd.f32 %v2513, 1.0
    %v2540 = vadd.f32 %v2515, 1.0
    %v2541 = vadd.f32 %v2517, 1.0
    %v2542 = vadd.f32 %v2519, 1.0
    %v2543 = vadd.f32 %v2521, 1.0
    %v2544 = vadd.f32 %v2523, 1.0
    %v2545 = vadd.f32 %v2525, 1.0
    %v2546 = vadd.f32 %v2527, 1.0
    %v2547 = vadd.f32 %v2529, 1.0
    %v2548 = vadd.f32 %v2531, 1.0
    %v2549 = vadd.f32 %v2533, 1.0
    %v2550 = vadd.f32 %v2535, 1.0
    %v2551 = vadd.f32 %v2537, 1.0
    %v2552 = vrcp.pop %v2538
    %v2553 = vrcp.pop %v2539
    %v2554 = vrcp.pop %v2540
    %v2555 = vrcp.pop %v2541
    %v2556 = vrcp.pop %v2542
    %v2557 = vrcp.pop %v2543
    %v2558 = vrcp.pop %v2544
    %v2559 = vrcp.pop %v2545
    %v2560 = vrcp.pop %v2546
    %v2561 = vrcp.pop %v2547
    %v2562 = vrcp.pop %v2548
    %v2563 = vrcp.pop %v2549
    %v2564 = vrcp.pop %v2550
    %v2565 = vrcp.pop %v2551
    %2566 = vst [vmem:[%s13] sm:$0xff] %v2552
    %2567 = vst [vmem:[%s13 + $0x8] sm:$0xff] %v2553
    %2568 = vst [vmem:[%s13 + $0x10] sm:$0xff] %v2554
    %2569 = vst [vmem:[%s13 + $0x18] sm:$0xff] %v2555
    %2570 = vst [vmem:[%s13 + $0x20] sm:$0xff] %v2556
    %2571 = vst [vmem:[%s13 + $0x28] sm:$0xff] %v2557
    %2572 = vst [vmem:[%s13 + $0x30] sm:$0xff] %v2558
    %2573 = vst [vmem:[%s13 + $0x38] sm:$0xff] %v2559
    %2574 = vst [vmem:[%s13 + $0x40] sm:$0xff] %v2560
    %2575 = vst [vmem:[%s13 + $0x48] sm:$0xff] %v2561
    %2576 = vst [vmem:[%s13 + $0x50] sm:$0xff] %v2562
    %2577 = vst [vmem:[%s13 + $0x58] sm:$0xff] %v2563
    %2578 = vst [vmem:[%s13 + $0x60] sm:$0xff] %v2564
    %2579 = vst [vmem:[%s13 + $0x68] sm:$0xff] %v2565
    // Predicated region
    $region74: #{autoencoder_forward.1} parent=1 // pred_check
      _
    $region75: #{autoencoder_forward.1} parent=1 // pred_check_branch
      %2581 = sbr.rel (0) target = $region77
    $region76: #{autoencoder_forward.1} parent=1 // pred_region
      _
    $region77: #{autoencoder_forward.1} parent=1 // pred_fallthru
      _
    // Predicated region
    $region78: #{autoencoder_forward.1} parent=1 // pred_check
      _
    $region79: #{autoencoder_forward.1} parent=1 // pred_check_branch
      %2583 = sbr.rel (0) target = $region81
    $region80: #{autoencoder_forward.1} parent=1 // pred_region
      _
    $region81: #{autoencoder_forward.1} parent=1 // pred_fallthru
      _
    %2584 = vsyncpa [#allocation3], 1
    %2585 = vsyncpa [#allocation5], 1
    %2586 = vsyncpa [#allocation8], 1

</llo_original>
